<compile_context>
chip_gen: v7x
topology: tpu7x:2x2x1
jax: 0.10.0
libtpu: 0.0.40
codegen_flags: <defaults>
</compile_context>

<pallas_src>
import jax
import jax.numpy as jnp
from jax import lax
from jax.experimental import pallas as pl
from jax.experimental.pallas import tpu as pltpu


# ----------------------------- Pallas kernel --------------------------------

def _layernorm(h, gamma, beta, eps=1e-5):
    m = jnp.mean(h, axis=-1, keepdims=True)
    c = h - m
    v = jnp.mean(c * c, axis=-1, keepdims=True)
    return c * lax.rsqrt(v + eps) * gamma + beta


def _leaky_relu(h, slope=0.01):
    return jnp.where(h >= 0, h, slope * h)


def _bf16(a):
    return a.astype(jnp.bfloat16)


def vae_fwd_kernel(
    x_ref,                                       # bf16 (batch_tile, num_items)
    w_e1_ref, b_e1_ref, g_e1_ref, be_e1_ref,     # encoder Linear1 + LayerNorm
    w_e2_ref, b_e2_ref,                          # encoder Linear2
    w_ml_ref, b_ml_ref,                          # fused+padded [mu | logvar | 0] heads
    w_d1p_ref, b_d1_ref, g_d1_ref, be_d1_ref,    # decoder Linear1 (K zero-padded) + LN
    w_d2_ref, b_d2_ref,                          # decoder Linear2
    recon_ref, mulv_ref,
):
    x = x_ref[...]                               # already bf16 -- no in-kernel cast

    # ---- encoder ----
    h = jnp.dot(x, w_e1_ref[...],
                preferred_element_type=jnp.float32) + b_e1_ref[...]
    h = _leaky_relu(_layernorm(h, g_e1_ref[...], be_e1_ref[...]))
    # Dropout: identity (eval mode)
    h = jnp.dot(_bf16(h), w_e2_ref[...],
                preferred_element_type=jnp.float32) + b_e2_ref[...]

    # ---- fused latent heads: one matmul producing lane-dense [mu | logvar | 0] ----
    mulv = jnp.dot(_bf16(h), w_ml_ref[...],
                   preferred_element_type=jnp.float32) + b_ml_ref[...]

    # ---- decoder ----
    # z = mu (eval-mode reparametrize). w_d1p has zero rows for the logvar / pad
    # lanes of mulv, so dot(mulv, w_d1p) == mu @ w_d1 and we avoid an in-kernel
    # sub-128-lane slice (which would materialize a masked relayout copy).
    d = jnp.dot(_bf16(mulv), w_d1p_ref[...],
                preferred_element_type=jnp.float32) + b_d1_ref[...]
    d = _leaky_relu(_layernorm(d, g_d1_ref[...], be_d1_ref[...]))
    # Dropout: identity (eval mode)
    logits = jnp.dot(_bf16(d), w_d2_ref[...],
                     preferred_element_type=jnp.float32) + b_d2_ref[...]
    # Sigmoid: exp + approx reciprocal both land on the EUP slot (no VALU divide).
    # TODO(synk): logits < ~-88 overflow exp(-logits) to inf; switch to a clamped /
    #             sign-split stable sigmoid if exact range behaviour matters.
    recon = pl.reciprocal(1.0 + jnp.exp(-logits), approx=True)

    recon_ref[...] = recon.astype(recon_ref.dtype)
    mulv_ref[...] = mulv.astype(mulv_ref.dtype)


# ------------------------------ wrapper --------------------------------------

def _vmem_limit_bytes():
    """Generation-aware VMEM limit with headroom."""
    try:
        cap = pltpu.get_tpu_info().vmem_capacity_bytes
    except Exception:
        cap = None
    if cap is not None and cap >= 100 * 1024 * 1024:   # v5e / v6e: 128 MiB physical
        return 96 * 1024 * 1024
    return 48 * 1024 * 1024                            # v7x: 64 MiB physical / unknown


def vae_forward(x, params, *, batch_tile=None):
    """Full eval-mode VAE forward in one Pallas kernel, tiled over the batch."""
    B, num_items = x.shape
    hidden = params["w_e1"].shape[1]
    half = params["w_e2"].shape[1]
    latent = params["w_pos"].shape[1]
    latent2 = 2 * latent
    latent2_pad = max(128, ((latent2 + 127) // 128) * 128)   # lane-dense mulv slab

    # 128 rows: fills v5e's 128x128 MXU, gives v7x's 2 TCs >=2 parallel steps once
    # B >= 256, halves the per-step x/recon granule vs. 256. Clamp to B so a toy
    # batch is a single grid step.
    if batch_tile is None:
        batch_tile = min(B, 128)
    assert B % batch_tile == 0, "B must be a multiple of batch_tile"
    grid = (B // batch_tile,)

    # x is implicit-feedback {0,1} data -> exact in bf16. Pass bf16 in from the
    # caller to make this a no-op and realize the halved input DMA.
    x_in = x if x.dtype == jnp.bfloat16 else x.astype(jnp.bfloat16)

    # Fuse the two latent heads and zero-pad to 128 output lanes.
    w_ml = jnp.concatenate([params["w_pos"], params["w_neg"]], axis=1)
    b_ml = jnp.concatenate([params["b_pos"], params["b_neg"]], axis=1)
    pad = latent2_pad - latent2
    if pad:
        w_ml = jnp.concatenate([w_ml, jnp.zeros((half, pad), w_ml.dtype)], axis=1)
        b_ml = jnp.concatenate([b_ml, jnp.zeros((1, pad), b_ml.dtype)], axis=1)
    # Decoder first-layer weight with K padded to latent2_pad (zero rows beyond mu).
    w_d1p = jnp.zeros((latent2_pad, hidden), params["w_d1"].dtype)
    w_d1p = w_d1p.at[:latent, :].set(params["w_d1"])

    args = (
        x_in,
        params["w_e1"], params["b_e1"], params["g_e1"], params["be_e1"],
        params["w_e2"], params["b_e2"],
        w_ml, b_ml,
        w_d1p, params["b_d1"], params["g_d1"], params["be_d1"],
        params["w_d2"], params["b_d2"],
    )

    out_shapes = (
        jax.ShapeDtypeStruct((B, num_items), jnp.bfloat16),    # recon (bf16 writeback)
        jax.ShapeDtypeStruct((B, latent2_pad), jnp.float32),   # [mu | logvar | pad]
    )

    def build(single_buffer_weights):
        def const_spec(shape):
            idx = lambda i, _s=shape: tuple(0 for _ in _s)
            if single_buffer_weights:
                # grid-invariant block: one VMEM buffer instead of two
                return pl.BlockSpec(shape, idx, pipeline_mode=pl.Buffered(1))
            return pl.BlockSpec(shape, idx)

        in_specs = [
            pl.BlockSpec((batch_tile, num_items), lambda i: (i, 0)),       # x
            const_spec((num_items, hidden)), const_spec((1, hidden)),      # w_e1, b_e1
            const_spec((1, hidden)), const_spec((1, hidden)),              # g_e1, be_e1
            const_spec((hidden, half)), const_spec((1, half)),             # w_e2, b_e2
            const_spec((half, latent2_pad)), const_spec((1, latent2_pad)), # w_ml, b_ml
            const_spec((latent2_pad, hidden)), const_spec((1, hidden)),    # w_d1p, b_d1
            const_spec((1, hidden)), const_spec((1, hidden)),              # g_d1, be_d1
            const_spec((hidden, num_items)), const_spec((1, num_items)),   # w_d2, b_d2
        ]
        out_specs = [
            pl.BlockSpec((batch_tile, num_items), lambda i: (i, 0)),       # recon
            pl.BlockSpec((batch_tile, latent2_pad), lambda i: (i, 0)),     # mulv
        ]
        return pl.pallas_call(
            vae_fwd_kernel,
            out_shape=out_shapes,
            grid_spec=pltpu.PrefetchScalarGridSpec(
                num_scalar_prefetch=0,
                grid=grid,
                in_specs=in_specs,
                out_specs=out_specs,
            ),
            compiler_params=pltpu.CompilerParams(
                dimension_semantics=("parallel",),
                vmem_limit_bytes=_vmem_limit_bytes(),
            ),
        )

    try:
        recon, mulv = build(single_buffer_weights=True)(*args)
    except Exception:
        # Fallback if this JAX build rejects pipeline_mode=Buffered(1) on inputs.
        recon, mulv = build(single_buffer_weights=False)(*args)

    mu = mulv[:, :latent]
    logvar = mulv[:, latent:latent2]
    return recon, mu, logvar


# --------------------------- deterministic init -------------------------------

def init_params(key, num_items, hidden_dim, latent_dim):
    half = hidden_dim // 2
    ks = jax.random.split(key, 6)

    def lin(k, fan_in, fan_out):
        # small deterministic init; weights stored (in, out) in bf16 (MXU dtype)
        w = (0.02 * jax.random.normal(k, (fan_in, fan_out), jnp.float32)
             ).astype(jnp.bfloat16)
        b = jnp.zeros((1, fan_out), jnp.float32)
        return w, b

    w_e1, b_e1 = lin(ks[0], num_items, hidden_dim)
    w_e2, b_e2 = lin(ks[1], hidden_dim, half)
    w_pos, b_pos = lin(ks[2], half, latent_dim)
    w_neg, b_neg = lin(ks[3], half, latent_dim)
    w_d1, b_d1 = lin(ks[4], latent_dim, hidden_dim)
    w_d2, b_d2 = lin(ks[5], hidden_dim, num_items)

    return dict(
        w_e1=w_e1, b_e1=b_e1,
        g_e1=jnp.ones((1, hidden_dim), jnp.float32),
        be_e1=jnp.zeros((1, hidden_dim), jnp.float32),
        w_e2=w_e2, b_e2=b_e2,
        w_pos=w_pos, b_pos=b_pos,
        w_neg=w_neg, b_neg=b_neg,
        w_d1=w_d1, b_d1=b_d1,
        g_d1=jnp.ones((1, hidden_dim), jnp.float32),
        be_d1=jnp.zeros((1, hidden_dim), jnp.float32),
        w_d2=w_d2, b_d2=b_d2,
    )


# ---------------------------- pure-JAX reference ------------------------------

def vae_forward_ref(x, p):
    f32 = lambda a: a.astype(jnp.float32)   # same bf16 weights / bf16 x, f32 math

    def ln(h, g, b, eps=1e-5):
        m = h.mean(-1, keepdims=True)
        v = ((h - m) ** 2).mean(-1, keepdims=True)
        return (h - m) / jnp.sqrt(v + eps) * g + b

    def lrelu(h):
        return jnp.where(h >= 0, h, 0.01 * h)

    xf = f32(x)
    h = xf @ f32(p["w_e1"]) + p["b_e1"]
    h = lrelu(ln(h, p["g_e1"], p["be_e1"]))
    h = h @ f32(p["w_e2"]) + p["b_e2"]
    mu = h @ f32(p["w_pos"]) + p["b_pos"]
    logvar = h @ f32(p["w_neg"]) + p["b_neg"]
    d = mu @ f32(p["w_d1"]) + p["b_d1"]
    d = lrelu(ln(d, p["g_d1"], p["be_d1"]))
    recon = jax.nn.sigmoid(d @ f32(p["w_d2"]) + p["b_d2"])
    return recon, mu, logvar


# ----------------------------------- main -------------------------------------

if __name__ == "__main__":
    B = 16
    NUM_ITEMS = 256
    HIDDEN = 64
    LATENT = 32

    key = jax.random.PRNGKey(0)
    k_x, k_p = jax.random.split(key)
    # implicit-feedback style input in {0, 1} -- exact in bf16
    x = (jax.random.uniform(k_x, (B, NUM_ITEMS), jnp.float32) > 0.8
         ).astype(jnp.bfloat16)
    params = init_params(k_p, NUM_ITEMS, HIDDEN, LATENT)

    recon, mu, logvar = vae_forward(x, params)   # B=16 -> one grid step
    jax.block_until_ready((recon, mu, logvar))

    # correctness check against pure-JAX reference (bf16 weight dots, bf16 recon
    # store, approx-reciprocal sigmoid -> relaxed tolerance)
    r_ref, mu_ref, lv_ref = vae_forward_ref(x, params)
    assert jnp.allclose(recon.astype(jnp.float32), r_ref, atol=2e-2), "recon mismatch"
    assert jnp.allclose(mu, mu_ref, atol=2e-2), "mu mismatch"
    assert jnp.allclose(logvar, lv_ref, atol=2e-2), "logvar mismatch"

    print("KERNEL_OK")
</pallas_src>

<mosaic_0001>
module attributes {stable_mosaic.version = 11 : i64} {
  func.func @vae_fwd_kernel(%arg0: i32, %arg1: memref<16x256xbf16, #tpu.memory_space<vmem>>, %arg2: memref<256x64xbf16, #tpu.memory_space<vmem>>, %arg3: memref<1x64xf32, #tpu.memory_space<vmem>>, %arg4: memref<1x64xf32, #tpu.memory_space<vmem>>, %arg5: memref<1x64xf32, #tpu.memory_space<vmem>>, %arg6: memref<64x32xbf16, #tpu.memory_space<vmem>>, %arg7: memref<1x32xf32, #tpu.memory_space<vmem>>, %arg8: memref<32x128xbf16, #tpu.memory_space<vmem>>, %arg9: memref<1x128xf32, #tpu.memory_space<vmem>>, %arg10: memref<128x64xbf16, #tpu.memory_space<vmem>>, %arg11: memref<1x64xf32, #tpu.memory_space<vmem>>, %arg12: memref<1x64xf32, #tpu.memory_space<vmem>>, %arg13: memref<1x64xf32, #tpu.memory_space<vmem>>, %arg14: memref<64x256xbf16, #tpu.memory_space<vmem>>, %arg15: memref<1x256xf32, #tpu.memory_space<vmem>>, %arg16: memref<16x256xbf16, #tpu.memory_space<vmem>>, %arg17: memref<16x128xf32, #tpu.memory_space<vmem>>) attributes {dimension_semantics = [#tpu.dimension_semantics<parallel>], iteration_bounds = array<i64: 1>, scalar_prefetch = 0 : i64, scratch_operands = 0 : i64, tpu.core_type = #tpu.core_type<tc>, window_params = [{transform_indices = @transform_0, window_bounds = array<i64: 16, 256>}, {pipeline_mode = #tpu.pipeline_mode<synchronous>, transform_indices = @transform_1, window_bounds = array<i64: 256, 64>}, {pipeline_mode = #tpu.pipeline_mode<synchronous>, transform_indices = @transform_2, window_bounds = array<i64: 1, 64>}, {pipeline_mode = #tpu.pipeline_mode<synchronous>, transform_indices = @transform_3, window_bounds = array<i64: 1, 64>}, {pipeline_mode = #tpu.pipeline_mode<synchronous>, transform_indices = @transform_4, window_bounds = array<i64: 1, 64>}, {pipeline_mode = #tpu.pipeline_mode<synchronous>, transform_indices = @transform_5, window_bounds = array<i64: 64, 32>}, {pipeline_mode = #tpu.pipeline_mode<synchronous>, transform_indices = @transform_6, window_bounds = array<i64: 1, 32>}, {pipeline_mode = #tpu.pipeline_mode<synchronous>, transform_indices = @transform_7, window_bounds = array<i64: 32, 128>}, {pipeline_mode = #tpu.pipeline_mode<synchronous>, transform_indices = @transform_8, window_bounds = array<i64: 1, 128>}, {pipeline_mode = #tpu.pipeline_mode<synchronous>, transform_indices = @transform_9, window_bounds = array<i64: 128, 64>}, {pipeline_mode = #tpu.pipeline_mode<synchronous>, transform_indices = @transform_10, window_bounds = array<i64: 1, 64>}, {pipeline_mode = #tpu.pipeline_mode<synchronous>, transform_indices = @transform_11, window_bounds = array<i64: 1, 64>}, {pipeline_mode = #tpu.pipeline_mode<synchronous>, transform_indices = @transform_12, window_bounds = array<i64: 1, 64>}, {pipeline_mode = #tpu.pipeline_mode<synchronous>, transform_indices = @transform_13, window_bounds = array<i64: 64, 256>}, {pipeline_mode = #tpu.pipeline_mode<synchronous>, transform_indices = @transform_14, window_bounds = array<i64: 1, 256>}, {transform_indices = @transform_15, window_bounds = array<i64: 16, 256>}, {transform_indices = @transform_16, window_bounds = array<i64: 16, 128>}]} {
    %c0 = arith.constant 0 : index
    %c0_0 = arith.constant 0 : index
    %0 = vector.load %arg1[%c0, %c0_0] : memref<16x256xbf16, #tpu.memory_space<vmem>>, vector<16x256xbf16>
    %c0_1 = arith.constant 0 : index
    %c0_2 = arith.constant 0 : index
    %1 = vector.load %arg2[%c0_1, %c0_2] : memref<256x64xbf16, #tpu.memory_space<vmem>>, vector<256x64xbf16>
    %cst = arith.constant dense<0.000000e+00> : vector<16x64xf32>
    %2 = tpu.matmul %0, %1, %cst {dimension_numbers = #tpu.dot_dimension_numbers<[1], [0], [0], [1], [0, 0, 1, 1], [], []>} : vector<16x256xbf16>, vector<256x64xbf16>, vector<16x64xf32> -> vector<16x64xf32>
    %c0_3 = arith.constant 0 : index
    %c0_4 = arith.constant 0 : index
    %3 = vector.load %arg3[%c0_3, %c0_4] : memref<1x64xf32, #tpu.memory_space<vmem>>, vector<1x64xf32>
    %4 = vector.broadcast %3 : vector<1x64xf32> to vector<16x64xf32>
    %5 = arith.addf %2, %4 : vector<16x64xf32>
    %c0_5 = arith.constant 0 : index
    %c0_6 = arith.constant 0 : index
    %6 = vector.load %arg4[%c0_5, %c0_6] : memref<1x64xf32, #tpu.memory_space<vmem>>, vector<1x64xf32>
    %c0_7 = arith.constant 0 : index
    %c0_8 = arith.constant 0 : index
    %7 = vector.load %arg5[%c0_7, %c0_8] : memref<1x64xf32, #tpu.memory_space<vmem>>, vector<1x64xf32>
    %cst_9 = arith.constant dense<0.000000e+00> : vector<16xf32>
    %8 = vector.multi_reduction <add>, %5, %cst_9 [1] : vector<16x64xf32> to vector<16xf32>
    %9 = vector.shape_cast %8 : vector<16xf32> to vector<16x1xf32>
    %cst_10 = arith.constant 6.400000e+01 : f32
    %10 = vector.broadcast %cst_10 : f32 to vector<16x1xf32>
    %11 = arith.divf %9, %10 : vector<16x1xf32>
    %12 = vector.broadcast %11 : vector<16x1xf32> to vector<16x64xf32>
    %13 = arith.subf %5, %12 : vector<16x64xf32>
    %14 = arith.mulf %13, %13 : vector<16x64xf32>
    %cst_11 = arith.constant dense<0.000000e+00> : vector<16xf32>
    %15 = vector.multi_reduction <add>, %14, %cst_11 [1] : vector<16x64xf32> to vector<16xf32>
    %16 = vector.shape_cast %15 : vector<16xf32> to vector<16x1xf32>
    %cst_12 = arith.constant 6.400000e+01 : f32
    %17 = vector.broadcast %cst_12 : f32 to vector<16x1xf32>
    %18 = arith.divf %16, %17 : vector<16x1xf32>
    %cst_13 = arith.constant 9.99999974E-6 : f32
    %19 = vector.broadcast %cst_13 : f32 to vector<16x1xf32>
    %20 = arith.addf %18, %19 : vector<16x1xf32>
    %21 = math.rsqrt %20 : vector<16x1xf32>
    %22 = vector.broadcast %21 : vector<16x1xf32> to vector<16x64xf32>
    %23 = arith.mulf %13, %22 : vector<16x64xf32>
    %24 = vector.broadcast %6 : vector<1x64xf32> to vector<16x64xf32>
    %25 = arith.mulf %23, %24 : vector<16x64xf32>
    %26 = vector.broadcast %7 : vector<1x64xf32> to vector<16x64xf32>
    %27 = arith.addf %25, %26 : vector<16x64xf32>
    %cst_14 = arith.constant 0.000000e+00 : f32
    %28 = vector.broadcast %cst_14 : f32 to vector<16x64xf32>
    %29 = arith.cmpf oge, %27, %28 : vector<16x64xf32>
    %cst_15 = arith.constant 0.00999999977 : f32
    %30 = vector.broadcast %cst_15 : f32 to vector<16x64xf32>
    %31 = arith.mulf %30, %27 : vector<16x64xf32>
    %32 = arith.select %29, %27, %31 : vector<16x64xi1>, vector<16x64xf32>
    %33 = arith.truncf %32 : vector<16x64xf32> to vector<16x64xbf16>
    %c0_16 = arith.constant 0 : index
    %c0_17 = arith.constant 0 : index
    %34 = vector.load %arg6[%c0_16, %c0_17] : memref<64x32xbf16, #tpu.memory_space<vmem>>, vector<64x32xbf16>
    %cst_18 = arith.constant dense<0.000000e+00> : vector<16x32xf32>
    %35 = tpu.matmul %33, %34, %cst_18 {dimension_numbers = #tpu.dot_dimension_numbers<[1], [0], [0], [1], [0, 0, 1, 1], [], []>} : vector<16x64xbf16>, vector<64x32xbf16>, vector<16x32xf32> -> vector<16x32xf32>
    %c0_19 = arith.constant 0 : index
    %c0_20 = arith.constant 0 : index
    %36 = vector.load %arg7[%c0_19, %c0_20] : memref<1x32xf32, #tpu.memory_space<vmem>>, vector<1x32xf32>
    %37 = vector.broadcast %36 : vector<1x32xf32> to vector<16x32xf32>
    %38 = arith.addf %35, %37 : vector<16x32xf32>
    %39 = arith.truncf %38 : vector<16x32xf32> to vector<16x32xbf16>
    %c0_21 = arith.constant 0 : index
    %c0_22 = arith.constant 0 : index
    %40 = vector.load %arg8[%c0_21, %c0_22] : memref<32x128xbf16, #tpu.memory_space<vmem>>, vector<32x128xbf16>
    %cst_23 = arith.constant dense<0.000000e+00> : vector<16x128xf32>
    %41 = tpu.matmul %39, %40, %cst_23 {dimension_numbers = #tpu.dot_dimension_numbers<[1], [0], [0], [1], [0, 0, 1, 1], [], []>} : vector<16x32xbf16>, vector<32x128xbf16>, vector<16x128xf32> -> vector<16x128xf32>
    %c0_24 = arith.constant 0 : index
    %c0_25 = arith.constant 0 : index
    %42 = vector.load %arg9[%c0_24, %c0_25] : memref<1x128xf32, #tpu.memory_space<vmem>>, vector<1x128xf32>
    %43 = vector.broadcast %42 : vector<1x128xf32> to vector<16x128xf32>
    %44 = arith.addf %41, %43 : vector<16x128xf32>
    %45 = arith.truncf %44 : vector<16x128xf32> to vector<16x128xbf16>
    %c0_26 = arith.constant 0 : index
    %c0_27 = arith.constant 0 : index
    %46 = vector.load %arg10[%c0_26, %c0_27] : memref<128x64xbf16, #tpu.memory_space<vmem>>, vector<128x64xbf16>
    %cst_28 = arith.constant dense<0.000000e+00> : vector<16x64xf32>
    %47 = tpu.matmul %45, %46, %cst_28 {dimension_numbers = #tpu.dot_dimension_numbers<[1], [0], [0], [1], [0, 0, 1, 1], [], []>} : vector<16x128xbf16>, vector<128x64xbf16>, vector<16x64xf32> -> vector<16x64xf32>
    %c0_29 = arith.constant 0 : index
    %c0_30 = arith.constant 0 : index
    %48 = vector.load %arg11[%c0_29, %c0_30] : memref<1x64xf32, #tpu.memory_space<vmem>>, vector<1x64xf32>
    %49 = vector.broadcast %48 : vector<1x64xf32> to vector<16x64xf32>
    %50 = arith.addf %47, %49 : vector<16x64xf32>
    %c0_31 = arith.constant 0 : index
    %c0_32 = arith.constant 0 : index
    %51 = vector.load %arg12[%c0_31, %c0_32] : memref<1x64xf32, #tpu.memory_space<vmem>>, vector<1x64xf32>
    %c0_33 = arith.constant 0 : index
    %c0_34 = arith.constant 0 : index
    %52 = vector.load %arg13[%c0_33, %c0_34] : memref<1x64xf32, #tpu.memory_space<vmem>>, vector<1x64xf32>
    %cst_35 = arith.constant dense<0.000000e+00> : vector<16xf32>
    %53 = vector.multi_reduction <add>, %50, %cst_35 [1] : vector<16x64xf32> to vector<16xf32>
    %54 = vector.shape_cast %53 : vector<16xf32> to vector<16x1xf32>
    %cst_36 = arith.constant 6.400000e+01 : f32
    %55 = vector.broadcast %cst_36 : f32 to vector<16x1xf32>
    %56 = arith.divf %54, %55 : vector<16x1xf32>
    %57 = vector.broadcast %56 : vector<16x1xf32> to vector<16x64xf32>
    %58 = arith.subf %50, %57 : vector<16x64xf32>
    %59 = arith.mulf %58, %58 : vector<16x64xf32>
    %cst_37 = arith.constant dense<0.000000e+00> : vector<16xf32>
    %60 = vector.multi_reduction <add>, %59, %cst_37 [1] : vector<16x64xf32> to vector<16xf32>
    %61 = vector.shape_cast %60 : vector<16xf32> to vector<16x1xf32>
    %cst_38 = arith.constant 6.400000e+01 : f32
    %62 = vector.broadcast %cst_38 : f32 to vector<16x1xf32>
    %63 = arith.divf %61, %62 : vector<16x1xf32>
    %cst_39 = arith.constant 9.99999974E-6 : f32
    %64 = vector.broadcast %cst_39 : f32 to vector<16x1xf32>
    %65 = arith.addf %63, %64 : vector<16x1xf32>
    %66 = math.rsqrt %65 : vector<16x1xf32>
    %67 = vector.broadcast %66 : vector<16x1xf32> to vector<16x64xf32>
    %68 = arith.mulf %58, %67 : vector<16x64xf32>
    %69 = vector.broadcast %51 : vector<1x64xf32> to vector<16x64xf32>
    %70 = arith.mulf %68, %69 : vector<16x64xf32>
    %71 = vector.broadcast %52 : vector<1x64xf32> to vector<16x64xf32>
    %72 = arith.addf %70, %71 : vector<16x64xf32>
    %cst_40 = arith.constant 0.000000e+00 : f32
    %73 = vector.broadcast %cst_40 : f32 to vector<16x64xf32>
    %74 = arith.cmpf oge, %72, %73 : vector<16x64xf32>
    %cst_41 = arith.constant 0.00999999977 : f32
    %75 = vector.broadcast %cst_41 : f32 to vector<16x64xf32>
    %76 = arith.mulf %75, %72 : vector<16x64xf32>
    %77 = arith.select %74, %72, %76 : vector<16x64xi1>, vector<16x64xf32>
    %78 = arith.truncf %77 : vector<16x64xf32> to vector<16x64xbf16>
    %c0_42 = arith.constant 0 : index
    %c0_43 = arith.constant 0 : index
    %79 = vector.load %arg14[%c0_42, %c0_43] : memref<64x256xbf16, #tpu.memory_space<vmem>>, vector<64x256xbf16>
    %cst_44 = arith.constant dense<0.000000e+00> : vector<16x256xf32>
    %80 = tpu.matmul %78, %79, %cst_44 {dimension_numbers = #tpu.dot_dimension_numbers<[1], [0], [0], [1], [0, 0, 1, 1], [], []>} : vector<16x64xbf16>, vector<64x256xbf16>, vector<16x256xf32> -> vector<16x256xf32>
    %c0_45 = arith.constant 0 : index
    %c0_46 = arith.constant 0 : index
    %81 = vector.load %arg15[%c0_45, %c0_46] : memref<1x256xf32, #tpu.memory_space<vmem>>, vector<1x256xf32>
    %82 = vector.broadcast %81 : vector<1x256xf32> to vector<16x256xf32>
    %83 = arith.addf %80, %82 : vector<16x256xf32>
    %cst_47 = arith.constant 0.000000e+00 : f32
    %84 = vector.broadcast %cst_47 : f32 to vector<16x256xf32>
    %85 = arith.subf %84, %83 : vector<16x256xf32>
    %86 = math.exp %85 : vector<16x256xf32>
    %cst_48 = arith.constant 1.000000e+00 : f32
    %87 = vector.broadcast %cst_48 : f32 to vector<16x256xf32>
    %88 = arith.addf %87, %86 : vector<16x256xf32>
    %89 = tpu.reciprocal %88 {approx = true} : vector<16x256xf32> -> vector<16x256xf32>
    %90 = arith.truncf %89 : vector<16x256xf32> to vector<16x256xbf16>
    %c0_49 = arith.constant 0 : index
    %c0_50 = arith.constant 0 : index
    %91 = vector.load %arg16[%c0_49, %c0_50] : memref<16x256xbf16, #tpu.memory_space<vmem>>, vector<16x256xbf16>
    tpu.vector_store %arg16[%c0_49, %c0_50], %90 {strides = array<i32>} : memref<16x256xbf16, #tpu.memory_space<vmem>>, vector<16x256xbf16>,
    %c0_51 = arith.constant 0 : index
    %c0_52 = arith.constant 0 : index
    %92 = vector.load %arg17[%c0_51, %c0_52] : memref<16x128xf32, #tpu.memory_space<vmem>>, vector<16x128xf32>
    tpu.vector_store %arg17[%c0_51, %c0_52], %44 {strides = array<i32>} : memref<16x128xf32, #tpu.memory_space<vmem>>, vector<16x128xf32>,
    return
  }
  func.func @transform_0(%arg0: i32) -> (i32, i32) {
    %c0_i32 = arith.constant 0 : i32
    %c0_i32_0 = arith.constant 0 : i32
    return %arg0, %c0_i32 : i32, i32
  }
  func.func @transform_1(%arg0: i32) -> (i32, i32) {
    %c0_i32 = arith.constant 0 : i32
    %c0_i32_0 = arith.constant 0 : i32
    %c0_i32_1 = arith.constant 0 : i32
    return %c0_i32, %c0_i32_0 : i32, i32
  }
  func.func @transform_2(%arg0: i32) -> (i32, i32) {
    %c0_i32 = arith.constant 0 : i32
    %c0_i32_0 = arith.constant 0 : i32
    %c0_i32_1 = arith.constant 0 : i32
    return %c0_i32, %c0_i32_0 : i32, i32
  }
  func.func @transform_3(%arg0: i32) -> (i32, i32) {
    %c0_i32 = arith.constant 0 : i32
    %c0_i32_0 = arith.constant 0 : i32
    %c0_i32_1 = arith.constant 0 : i32
    return %c0_i32, %c0_i32_0 : i32, i32
  }
  func.func @transform_4(%arg0: i32) -> (i32, i32) {
    %c0_i32 = arith.constant 0 : i32
    %c0_i32_0 = arith.constant 0 : i32
    %c0_i32_1 = arith.constant 0 : i32
    return %c0_i32, %c0_i32_0 : i32, i32
  }
  func.func @transform_5(%arg0: i32) -> (i32, i32) {
    %c0_i32 = arith.constant 0 : i32
    %c0_i32_0 = arith.constant 0 : i32
    %c0_i32_1 = arith.constant 0 : i32
    return %c0_i32, %c0_i32_0 : i32, i32
  }
  func.func @transform_6(%arg0: i32) -> (i32, i32) {
    %c0_i32 = arith.constant 0 : i32
    %c0_i32_0 = arith.constant 0 : i32
    %c0_i32_1 = arith.constant 0 : i32
    return %c0_i32, %c0_i32_0 : i32, i32
  }
  func.func @transform_7(%arg0: i32) -> (i32, i32) {
    %c0_i32 = arith.constant 0 : i32
    %c0_i32_0 = arith.constant 0 : i32
    %c0_i32_1 = arith.constant 0 : i32
    return %c0_i32, %c0_i32_0 : i32, i32
  }
  func.func @transform_8(%arg0: i32) -> (i32, i32) {
    %c0_i32 = arith.constant 0 : i32
    %c0_i32_0 = arith.constant 0 : i32
    %c0_i32_1 = arith.constant 0 : i32
    return %c0_i32, %c0_i32_0 : i32, i32
  }
  func.func @transform_9(%arg0: i32) -> (i32, i32) {
    %c0_i32 = arith.constant 0 : i32
    %c0_i32_0 = arith.constant 0 : i32
    %c0_i32_1 = arith.constant 0 : i32
    return %c0_i32, %c0_i32_0 : i32, i32
  }
  func.func @transform_10(%arg0: i32) -> (i32, i32) {
    %c0_i32 = arith.constant 0 : i32
    %c0_i32_0 = arith.constant 0 : i32
    %c0_i32_1 = arith.constant 0 : i32
    return %c0_i32, %c0_i32_0 : i32, i32
  }
  func.func @transform_11(%arg0: i32) -> (i32, i32) {
    %c0_i32 = arith.constant 0 : i32
    %c0_i32_0 = arith.constant 0 : i32
    %c0_i32_1 = arith.constant 0 : i32
    return %c0_i32, %c0_i32_0 : i32, i32
  }
  func.func @transform_12(%arg0: i32) -> (i32, i32) {
    %c0_i32 = arith.constant 0 : i32
    %c0_i32_0 = arith.constant 0 : i32
    %c0_i32_1 = arith.constant 0 : i32
    return %c0_i32, %c0_i32_0 : i32, i32
  }
  func.func @transform_13(%arg0: i32) -> (i32, i32) {
    %c0_i32 = arith.constant 0 : i32
    %c0_i32_0 = arith.constant 0 : i32
    %c0_i32_1 = arith.constant 0 : i32
    return %c0_i32, %c0_i32_0 : i32, i32
  }
  func.func @transform_14(%arg0: i32) -> (i32, i32) {
    %c0_i32 = arith.constant 0 : i32
    %c0_i32_0 = arith.constant 0 : i32
    %c0_i32_1 = arith.constant 0 : i32
    return %c0_i32, %c0_i32_0 : i32, i32
  }
  func.func @transform_15(%arg0: i32) -> (i32, i32) {
    %c0_i32 = arith.constant 0 : i32
    %c0_i32_0 = arith.constant 0 : i32
    return %arg0, %c0_i32 : i32, i32
  }
  func.func @transform_16(%arg0: i32) -> (i32, i32) {
    %c0_i32 = arith.constant 0 : i32
    %c0_i32_0 = arith.constant 0 : i32
    return %arg0, %c0_i32 : i32, i32
  }
}

module attributes {stable_mosaic.version = 11 : i64} {
  func.func @vae_fwd_kernel(%arg0: i32, %arg1: memref<16x256xbf16, #tpu.memory_space<vmem>>, %arg2: memref<256x64xbf16, #tpu.memory_space<vmem>>, %arg3: memref<1x64xf32, #tpu.memory_space<vmem>>, %arg4: memref<1x64xf32, #tpu.memory_space<vmem>>, %arg5: memref<1x64xf32, #tpu.memory_space<vmem>>, %arg6: memref<64x32xbf16, #tpu.memory_space<vmem>>, %arg7: memref<1x32xf32, #tpu.memory_space<vmem>>, %arg8: memref<32x128xbf16, #tpu.memory_space<vmem>>, %arg9: memref<1x128xf32, #tpu.memory_space<vmem>>, %arg10: memref<128x64xbf16, #tpu.memory_space<vmem>>, %arg11: memref<1x64xf32, #tpu.memory_space<vmem>>, %arg12: memref<1x64xf32, #tpu.memory_space<vmem>>, %arg13: memref<1x64xf32, #tpu.memory_space<vmem>>, %arg14: memref<64x256xbf16, #tpu.memory_space<vmem>>, %arg15: memref<1x256xf32, #tpu.memory_space<vmem>>, %arg16: memref<16x256xbf16, #tpu.memory_space<vmem>>, %arg17: memref<16x128xf32, #tpu.memory_space<vmem>>) attributes {dimension_semantics = [#tpu.dimension_semantics<parallel>], iteration_bounds = array<i64: 1>, scalar_prefetch = 0 : i64, scratch_operands = 0 : i64, tpu.core_type = #tpu.core_type<tc>, window_params = [{transform_indices = @transform_0, window_bounds = array<i64: 16, 256>}, {pipeline_mode = #tpu.pipeline_mode<synchronous>, transform_indices = @transform_1, window_bounds = array<i64: 256, 64>}, {pipeline_mode = #tpu.pipeline_mode<synchronous>, transform_indices = @transform_2, window_bounds = array<i64: 1, 64>}, {pipeline_mode = #tpu.pipeline_mode<synchronous>, transform_indices = @transform_3, window_bounds = array<i64: 1, 64>}, {pipeline_mode = #tpu.pipeline_mode<synchronous>, transform_indices = @transform_4, window_bounds = array<i64: 1, 64>}, {pipeline_mode = #tpu.pipeline_mode<synchronous>, transform_indices = @transform_5, window_bounds = array<i64: 64, 32>}, {pipeline_mode = #tpu.pipeline_mode<synchronous>, transform_indices = @transform_6, window_bounds = array<i64: 1, 32>}, {pipeline_mode = #tpu.pipeline_mode<synchronous>, transform_indices = @transform_7, window_bounds = array<i64: 32, 128>}, {pipeline_mode = #tpu.pipeline_mode<synchronous>, transform_indices = @transform_8, window_bounds = array<i64: 1, 128>}, {pipeline_mode = #tpu.pipeline_mode<synchronous>, transform_indices = @transform_9, window_bounds = array<i64: 128, 64>}, {pipeline_mode = #tpu.pipeline_mode<synchronous>, transform_indices = @transform_10, window_bounds = array<i64: 1, 64>}, {pipeline_mode = #tpu.pipeline_mode<synchronous>, transform_indices = @transform_11, window_bounds = array<i64: 1, 64>}, {pipeline_mode = #tpu.pipeline_mode<synchronous>, transform_indices = @transform_12, window_bounds = array<i64: 1, 64>}, {pipeline_mode = #tpu.pipeline_mode<synchronous>, transform_indices = @transform_13, window_bounds = array<i64: 64, 256>}, {pipeline_mode = #tpu.pipeline_mode<synchronous>, transform_indices = @transform_14, window_bounds = array<i64: 1, 256>}, {transform_indices = @transform_15, window_bounds = array<i64: 16, 256>}, {transform_indices = @transform_16, window_bounds = array<i64: 16, 128>}]} {
    %c0 = arith.constant 0 : index
    %c0_0 = arith.constant 0 : index
    %0 = vector.load %arg1[%c0, %c0_0] : memref<16x256xbf16, #tpu.memory_space<vmem>>, vector<16x256xbf16>
    %c0_1 = arith.constant 0 : index
    %c0_2 = arith.constant 0 : index
    %1 = vector.load %arg2[%c0_1, %c0_2] : memref<256x64xbf16, #tpu.memory_space<vmem>>, vector<256x64xbf16>
    %cst = arith.constant dense<0.000000e+00> : vector<16x64xf32>
    %2 = tpu.matmul %0, %1, %cst {dimension_numbers = #tpu.dot_dimension_numbers<[1], [0], [0], [1], [0, 0, 1, 1], [], []>} : vector<16x256xbf16>, vector<256x64xbf16>, vector<16x64xf32> -> vector<16x64xf32>
    %c0_3 = arith.constant 0 : index
    %c0_4 = arith.constant 0 : index
    %3 = vector.load %arg3[%c0_3, %c0_4] : memref<1x64xf32, #tpu.memory_space<vmem>>, vector<1x64xf32>
    %4 = vector.broadcast %3 : vector<1x64xf32> to vector<16x64xf32>
    %5 = arith.addf %2, %4 : vector<16x64xf32>
    %c0_5 = arith.constant 0 : index
    %c0_6 = arith.constant 0 : index
    %6 = vector.load %arg4[%c0_5, %c0_6] : memref<1x64xf32, #tpu.memory_space<vmem>>, vector<1x64xf32>
    %c0_7 = arith.constant 0 : index
    %c0_8 = arith.constant 0 : index
    %7 = vector.load %arg5[%c0_7, %c0_8] : memref<1x64xf32, #tpu.memory_space<vmem>>, vector<1x64xf32>
    %cst_9 = arith.constant dense<0.000000e+00> : vector<16xf32>
    %8 = vector.multi_reduction <add>, %5, %cst_9 [1] : vector<16x64xf32> to vector<16xf32>
    %9 = vector.shape_cast %8 : vector<16xf32> to vector<16x1xf32>
    %cst_10 = arith.constant 6.400000e+01 : f32
    %10 = vector.broadcast %cst_10 : f32 to vector<16x1xf32>
    %11 = arith.divf %9, %10 : vector<16x1xf32>
    %12 = vector.broadcast %11 : vector<16x1xf32> to vector<16x64xf32>
    %13 = arith.subf %5, %12 : vector<16x64xf32>
    %14 = arith.mulf %13, %13 : vector<16x64xf32>
    %cst_11 = arith.constant dense<0.000000e+00> : vector<16xf32>
    %15 = vector.multi_reduction <add>, %14, %cst_11 [1] : vector<16x64xf32> to vector<16xf32>
    %16 = vector.shape_cast %15 : vector<16xf32> to vector<16x1xf32>
    %cst_12 = arith.constant 6.400000e+01 : f32
    %17 = vector.broadcast %cst_12 : f32 to vector<16x1xf32>
    %18 = arith.divf %16, %17 : vector<16x1xf32>
    %cst_13 = arith.constant 9.99999974E-6 : f32
    %19 = vector.broadcast %cst_13 : f32 to vector<16x1xf32>
    %20 = arith.addf %18, %19 : vector<16x1xf32>
    %21 = math.rsqrt %20 : vector<16x1xf32>
    %22 = vector.broadcast %21 : vector<16x1xf32> to vector<16x64xf32>
    %23 = arith.mulf %13, %22 : vector<16x64xf32>
    %24 = vector.broadcast %6 : vector<1x64xf32> to vector<16x64xf32>
    %25 = arith.mulf %23, %24 : vector<16x64xf32>
    %26 = vector.broadcast %7 : vector<1x64xf32> to vector<16x64xf32>
    %27 = arith.addf %25, %26 : vector<16x64xf32>
    %cst_14 = arith.constant 0.000000e+00 : f32
    %28 = vector.broadcast %cst_14 : f32 to vector<16x64xf32>
    %29 = arith.cmpf oge, %27, %28 : vector<16x64xf32>
    %cst_15 = arith.constant 0.00999999977 : f32
    %30 = vector.broadcast %cst_15 : f32 to vector<16x64xf32>
    %31 = arith.mulf %30, %27 : vector<16x64xf32>
    %32 = arith.select %29, %27, %31 : vector<16x64xi1>, vector<16x64xf32>
    %33 = arith.truncf %32 : vector<16x64xf32> to vector<16x64xbf16>
    %c0_16 = arith.constant 0 : index
    %c0_17 = arith.constant 0 : index
    %34 = vector.load %arg6[%c0_16, %c0_17] : memref<64x32xbf16, #tpu.memory_space<vmem>>, vector<64x32xbf16>
    %cst_18 = arith.constant dense<0.000000e+00> : vector<16x32xf32>
    %35 = tpu.matmul %33, %34, %cst_18 {dimension_numbers = #tpu.dot_dimension_numbers<[1], [0], [0], [1], [0, 0, 1, 1], [], []>} : vector<16x64xbf16>, vector<64x32xbf16>, vector<16x32xf32> -> vector<16x32xf32>
    %c0_19 = arith.constant 0 : index
    %c0_20 = arith.constant 0 : index
    %36 = vector.load %arg7[%c0_19, %c0_20] : memref<1x32xf32, #tpu.memory_space<vmem>>, vector<1x32xf32>
    %37 = vector.broadcast %36 : vector<1x32xf32> to vector<16x32xf32>
    %38 = arith.addf %35, %37 : vector<16x32xf32>
    %39 = arith.truncf %38 : vector<16x32xf32> to vector<16x32xbf16>
    %c0_21 = arith.constant 0 : index
    %c0_22 = arith.constant 0 : index
    %40 = vector.load %arg8[%c0_21, %c0_22] : memref<32x128xbf16, #tpu.memory_space<vmem>>, vector<32x128xbf16>
    %cst_23 = arith.constant dense<0.000000e+00> : vector<16x128xf32>
    %41 = tpu.matmul %39, %40, %cst_23 {dimension_numbers = #tpu.dot_dimension_numbers<[1], [0], [0], [1], [0, 0, 1, 1], [], []>} : vector<16x32xbf16>, vector<32x128xbf16>, vector<16x128xf32> -> vector<16x128xf32>
    %c0_24 = arith.constant 0 : index
    %c0_25 = arith.constant 0 : index
    %42 = vector.load %arg9[%c0_24, %c0_25] : memref<1x128xf32, #tpu.memory_space<vmem>>, vector<1x128xf32>
    %43 = vector.broadcast %42 : vector<1x128xf32> to vector<16x128xf32>
    %44 = arith.addf %41, %43 : vector<16x128xf32>
    %45 = arith.truncf %44 : vector<16x128xf32> to vector<16x128xbf16>
    %c0_26 = arith.constant 0 : index
    %c0_27 = arith.constant 0 : index
    %46 = vector.load %arg10[%c0_26, %c0_27] : memref<128x64xbf16, #tpu.memory_space<vmem>>, vector<128x64xbf16>
    %cst_28 = arith.constant dense<0.000000e+00> : vector<16x64xf32>
    %47 = tpu.matmul %45, %46, %cst_28 {dimension_numbers = #tpu.dot_dimension_numbers<[1], [0], [0], [1], [0, 0, 1, 1], [], []>} : vector<16x128xbf16>, vector<128x64xbf16>, vector<16x64xf32> -> vector<16x64xf32>
    %c0_29 = arith.constant 0 : index
    %c0_30 = arith.constant 0 : index
    %48 = vector.load %arg11[%c0_29, %c0_30] : memref<1x64xf32, #tpu.memory_space<vmem>>, vector<1x64xf32>
    %49 = vector.broadcast %48 : vector<1x64xf32> to vector<16x64xf32>
    %50 = arith.addf %47, %49 : vector<16x64xf32>
    %c0_31 = arith.constant 0 : index
    %c0_32 = arith.constant 0 : index
    %51 = vector.load %arg12[%c0_31, %c0_32] : memref<1x64xf32, #tpu.memory_space<vmem>>, vector<1x64xf32>
    %c0_33 = arith.constant 0 : index
    %c0_34 = arith.constant 0 : index
    %52 = vector.load %arg13[%c0_33, %c0_34] : memref<1x64xf32, #tpu.memory_space<vmem>>, vector<1x64xf32>
    %cst_35 = arith.constant dense<0.000000e+00> : vector<16xf32>
    %53 = vector.multi_reduction <add>, %50, %cst_35 [1] : vector<16x64xf32> to vector<16xf32>
    %54 = vector.shape_cast %53 : vector<16xf32> to vector<16x1xf32>
    %cst_36 = arith.constant 6.400000e+01 : f32
    %55 = vector.broadcast %cst_36 : f32 to vector<16x1xf32>
    %56 = arith.divf %54, %55 : vector<16x1xf32>
    %57 = vector.broadcast %56 : vector<16x1xf32> to vector<16x64xf32>
    %58 = arith.subf %50, %57 : vector<16x64xf32>
    %59 = arith.mulf %58, %58 : vector<16x64xf32>
    %cst_37 = arith.constant dense<0.000000e+00> : vector<16xf32>
    %60 = vector.multi_reduction <add>, %59, %cst_37 [1] : vector<16x64xf32> to vector<16xf32>
    %61 = vector.shape_cast %60 : vector<16xf32> to vector<16x1xf32>
    %cst_38 = arith.constant 6.400000e+01 : f32
    %62 = vector.broadcast %cst_38 : f32 to vector<16x1xf32>
    %63 = arith.divf %61, %62 : vector<16x1xf32>
    %cst_39 = arith.constant 9.99999974E-6 : f32
    %64 = vector.broadcast %cst_39 : f32 to vector<16x1xf32>
    %65 = arith.addf %63, %64 : vector<16x1xf32>
    %66 = math.rsqrt %65 : vector<16x1xf32>
    %67 = vector.broadcast %66 : vector<16x1xf32> to vector<16x64xf32>
    %68 = arith.mulf %58, %67 : vector<16x64xf32>
    %69 = vector.broadcast %51 : vector<1x64xf32> to vector<16x64xf32>
    %70 = arith.mulf %68, %69 : vector<16x64xf32>
    %71 = vector.broadcast %52 : vector<1x64xf32> to vector<16x64xf32>
    %72 = arith.addf %70, %71 : vector<16x64xf32>
    %cst_40 = arith.constant 0.000000e+00 : f32
    %73 = vector.broadcast %cst_40 : f32 to vector<16x64xf32>
    %74 = arith.cmpf oge, %72, %73 : vector<16x64xf32>
    %cst_41 = arith.constant 0.00999999977 : f32
    %75 = vector.broadcast %cst_41 : f32 to vector<16x64xf32>
    %76 = arith.mulf %75, %72 : vector<16x64xf32>
    %77 = arith.select %74, %72, %76 : vector<16x64xi1>, vector<16x64xf32>
    %78 = arith.truncf %77 : vector<16x64xf32> to vector<16x64xbf16>
    %c0_42 = arith.constant 0 : index
    %c0_43 = arith.constant 0 : index
    %79 = vector.load %arg14[%c0_42, %c0_43] : memref<64x256xbf16, #tpu.memory_space<vmem>>, vector<64x256xbf16>
    %cst_44 = arith.constant dense<0.000000e+00> : vector<16x256xf32>
    %80 = tpu.matmul %78, %79, %cst_44 {dimension_numbers = #tpu.dot_dimension_numbers<[1], [0], [0], [1], [0, 0, 1, 1], [], []>} : vector<16x64xbf16>, vector<64x256xbf16>, vector<16x256xf32> -> vector<16x256xf32>
    %c0_45 = arith.constant 0 : index
    %c0_46 = arith.constant 0 : index
    %81 = vector.load %arg15[%c0_45, %c0_46] : memref<1x256xf32, #tpu.memory_space<vmem>>, vector<1x256xf32>
    %82 = vector.broadcast %81 : vector<1x256xf32> to vector<16x256xf32>
    %83 = arith.addf %80, %82 : vector<16x256xf32>
    %cst_47 = arith.constant 0.000000e+00 : f32
    %84 = vector.broadcast %cst_47 : f32 to vector<16x256xf32>
    %85 = arith.subf %84, %83 : vector<16x256xf32>
    %86 = math.exp %85 : vector<16x256xf32>
    %cst_48 = arith.constant 1.000000e+00 : f32
    %87 = vector.broadcast %cst_48 : f32 to vector<16x256xf32>
    %88 = arith.addf %87, %86 : vector<16x256xf32>
    %89 = tpu.reciprocal %88 {approx = true} : vector<16x256xf32> -> vector<16x256xf32>
    %90 = arith.truncf %89 : vector<16x256xf32> to vector<16x256xbf16>
    %c0_49 = arith.constant 0 : index
    %c0_50 = arith.constant 0 : index
    %91 = vector.load %arg16[%c0_49, %c0_50] : memref<16x256xbf16, #tpu.memory_space<vmem>>, vector<16x256xbf16>
    tpu.vector_store %arg16[%c0_49, %c0_50], %90 {strides = array<i32>} : memref<16x256xbf16, #tpu.memory_space<vmem>>, vector<16x256xbf16>,
    %c0_51 = arith.constant 0 : index
    %c0_52 = arith.constant 0 : index
    %92 = vector.load %arg17[%c0_51, %c0_52] : memref<16x128xf32, #tpu.memory_space<vmem>>, vector<16x128xf32>
    tpu.vector_store %arg17[%c0_51, %c0_52], %44 {strides = array<i32>} : memref<16x128xf32, #tpu.memory_space<vmem>>, vector<16x128xf32>,
    return
  }
  func.func @transform_0(%arg0: i32) -> (i32, i32) {
    %c0_i32 = arith.constant 0 : i32
    %c0_i32_0 = arith.constant 0 : i32
    return %arg0, %c0_i32 : i32, i32
  }
  func.func @transform_1(%arg0: i32) -> (i32, i32) {
    %c0_i32 = arith.constant 0 : i32
    %c0_i32_0 = arith.constant 0 : i32
    %c0_i32_1 = arith.constant 0 : i32
    return %c0_i32, %c0_i32_0 : i32, i32
  }
  func.func @transform_2(%arg0: i32) -> (i32, i32) {
    %c0_i32 = arith.constant 0 : i32
    %c0_i32_0 = arith.constant 0 : i32
    %c0_i32_1 = arith.constant 0 : i32
    return %c0_i32, %c0_i32_0 : i32, i32
  }
  func.func @transform_3(%arg0: i32) -> (i32, i32) {
    %c0_i32 = arith.constant 0 : i32
    %c0_i32_0 = arith.constant 0 : i32
    %c0_i32_1 = arith.constant 0 : i32
    return %c0_i32, %c0_i32_0 : i32, i32
  }
  func.func @transform_4(%arg0: i32) -> (i32, i32) {
    %c0_i32 = arith.constant 0 : i32
    %c0_i32_0 = arith.constant 0 : i32
    %c0_i32_1 = arith.constant 0 : i32
    return %c0_i32, %c0_i32_0 : i32, i32
  }
  func.func @transform_5(%arg0: i32) -> (i32, i32) {
    %c0_i32 = arith.constant 0 : i32
    %c0_i32_0 = arith.constant 0 : i32
    %c0_i32_1 = arith.constant 0 : i32
    return %c0_i32, %c0_i32_0 : i32, i32
  }
  func.func @transform_6(%arg0: i32) -> (i32, i32) {
    %c0_i32 = arith.constant 0 : i32
    %c0_i32_0 = arith.constant 0 : i32
    %c0_i32_1 = arith.constant 0 : i32
    return %c0_i32, %c0_i32_0 : i32, i32
  }
  func.func @transform_7(%arg0: i32) -> (i32, i32) {
    %c0_i32 = arith.constant 0 : i32
    %c0_i32_0 = arith.constant 0 : i32
    %c0_i32_1 = arith.constant 0 : i32
    return %c0_i32, %c0_i32_0 : i32, i32
  }
  func.func @transform_8(%arg0: i32) -> (i32, i32) {
    %c0_i32 = arith.constant 0 : i32
    %c0_i32_0 = arith.constant 0 : i32
    %c0_i32_1 = arith.constant 0 : i32
    return %c0_i32, %c0_i32_0 : i32, i32
  }
  func.func @transform_9(%arg0: i32) -> (i32, i32) {
    %c0_i32 = arith.constant 0 : i32
    %c0_i32_0 = arith.constant 0 : i32
    %c0_i32_1 = arith.constant 0 : i32
    return %c0_i32, %c0_i32_0 : i32, i32
  }
  func.func @transform_10(%arg0: i32) -> (i32, i32) {
    %c0_i32 = arith.constant 0 : i32
    %c0_i32_0 = arith.constant 0 : i32
    %c0_i32_1 = arith.constant 0 : i32
    return %c0_i32, %c0_i32_0 : i32, i32
  }
  func.func @transform_11(%arg0: i32) -> (i32, i32) {
    %c0_i32 = arith.constant 0 : i32
    %c0_i32_0 = arith.constant 0 : i32
    %c0_i32_1 = arith.constant 0 : i32
    return %c0_i32, %c0_i32_0 : i32, i32
  }
  func.func @transform_12(%arg0: i32) -> (i32, i32) {
    %c0_i32 = arith.constant 0 : i32
    %c0_i32_0 = arith.constant 0 : i32
    %c0_i32_1 = arith.constant 0 : i32
    return %c0_i32, %c0_i32_0 : i32, i32
  }
  func.func @transform_13(%arg0: i32) -> (i32, i32) {
    %c0_i32 = arith.constant 0 : i32
    %c0_i32_0 = arith.constant 0 : i32
    %c0_i32_1 = arith.constant 0 : i32
    return %c0_i32, %c0_i32_0 : i32, i32
  }
  func.func @transform_14(%arg0: i32) -> (i32, i32) {
    %c0_i32 = arith.constant 0 : i32
    %c0_i32_0 = arith.constant 0 : i32
    %c0_i32_1 = arith.constant 0 : i32
    return %c0_i32, %c0_i32_0 : i32, i32
  }
  func.func @transform_15(%arg0: i32) -> (i32, i32) {
    %c0_i32 = arith.constant 0 : i32
    %c0_i32_0 = arith.constant 0 : i32
    return %arg0, %c0_i32 : i32, i32
  }
  func.func @transform_16(%arg0: i32) -> (i32, i32) {
    %c0_i32 = arith.constant 0 : i32
    %c0_i32_0 = arith.constant 0 : i32
    return %arg0, %c0_i32 : i32, i32
  }
}

</mosaic_0001>

<llo_original>
// kernel: tpu_custom_call.1
$region0: #{tpu_custom_call.1}
  #allocation0 [shape = 'u32[]', space=smem, size = 0x4, offset = 0x4, fixed_abs, tag = 'smem constant byte address 0x4 - core index']
  #allocation1 [shape = 'u32[144,128]{1,0:T(1,128)}', space=vmem, size = 0x12000, scoped, tag = 'internal scratch']
  %s0 = inlined_call_operand.vmem [shape: bf16[16,256], index: 0, kind: input, shape index: {}]
  %s1 = inlined_call_operand.vmem [shape: bf16[256,64], index: 1, kind: input, shape index: {}]
  %s2 = inlined_call_operand.vmem [shape: f32[1,64], index: 2, kind: input, shape index: {}]
  %s3 = inlined_call_operand.vmem [shape: f32[1,64], index: 3, kind: input, shape index: {}]
  %s4 = inlined_call_operand.vmem [shape: f32[1,64], index: 4, kind: input, shape index: {}]
  %s5 = inlined_call_operand.vmem [shape: bf16[64,32], index: 5, kind: input, shape index: {}]
  %s6 = inlined_call_operand.vmem [shape: f32[1,32], index: 6, kind: input, shape index: {}]
  %s7 = inlined_call_operand.vmem [shape: bf16[32,128], index: 7, kind: input, shape index: {}]
  %s8 = inlined_call_operand.vmem [shape: f32[1,128], index: 8, kind: input, shape index: {}]
  %s9 = inlined_call_operand.vmem [shape: bf16[128,64], index: 9, kind: input, shape index: {}]
  %s10 = inlined_call_operand.vmem [shape: f32[1,64], index: 10, kind: input, shape index: {}]
  %s11 = inlined_call_operand.vmem [shape: f32[1,64], index: 11, kind: input, shape index: {}]
  %s12 = inlined_call_operand.vmem [shape: f32[1,64], index: 12, kind: input, shape index: {}]
  %s13 = inlined_call_operand.vmem [shape: bf16[64,256], index: 13, kind: input, shape index: {}]
  %s14 = inlined_call_operand.vmem [shape: f32[1,256], index: 14, kind: input, shape index: {}]
  %s15 = inlined_call_operand.hbm [shape: bf16[16,256], index: 15, kind: output, shape index: {0}]
  %s16 = inlined_call_operand.hbm [shape: f32[16,128], index: 16, kind: output, shape index: {1}]
  %17 = xla_tuple %s15, %s16
  %s18 = sld [smem:[#allocation0]]
  $region78: #{tpu_custom_call.1} parent=0
    _
  %s20 = ssub.s32 1, %s18
  %s21 = scalar_select 0, %s20, %s18
  $region1: #{tpu_custom_call.1} parent=0
    #allocation2 [shape = 'u8[8192]{0}', space=vmem, size = 0x2000, scoped, tag = 'output window, operand 0, single buffered']
    #allocation3 [shape = 's32[1]{0}', space=sflag, size = 0x4, scoped, tag = 'scoped memory for tpu_custom_call.1']
    #allocation4 [shape = 'u8[8192]{0}', space=vmem, size = 0x2000, scoped, tag = 'output window, operand 1, single buffered']
    #allocation5 [shape = 's32[1]{0}', space=sflag, size = 0x4, scoped, tag = 'scoped memory for tpu_custom_call.1']
    %22 = vsyncpa [#allocation3], 0
    %23 = vsyncpa [#allocation5], 0
    // Predicated region
    $region2: #{tpu_custom_call.1} parent=1 // pred_check
      _
    $region3: #{tpu_custom_call.1} parent=1 // pred_check_branch
      %25 = sbr.rel (0) target = $region5
    $region4: #{tpu_custom_call.1} parent=1 // pred_region
      _
    $region5: #{tpu_custom_call.1} parent=1 // pred_fallthru
      _
    // Predicated region
    $region6: #{tpu_custom_call.1} parent=1 // pred_check
      _
    $region7: #{tpu_custom_call.1} parent=1 // pred_check_branch
      %27 = sbr.rel (0) target = $region9
    $region8: #{tpu_custom_call.1} parent=1 // pred_region
      _
    $region9: #{tpu_custom_call.1} parent=1 // pred_fallthru
      _
    // Predicated region
    $region10: #{tpu_custom_call.1} parent=1 // pred_check
      _
    $region11: #{tpu_custom_call.1} parent=1 // pred_check_branch
      %29 = sbr.rel (0) target = $region13
    $region12: #{tpu_custom_call.1} parent=1 // pred_region
      _
    $region13: #{tpu_custom_call.1} parent=1 // pred_fallthru
      _
    // Predicated region
    $region14: #{tpu_custom_call.1} parent=1 // pred_check
      _
    $region15: #{tpu_custom_call.1} parent=1 // pred_check_branch
      %31 = sbr.rel (0) target = $region17
    $region16: #{tpu_custom_call.1} parent=1 // pred_region
      _
    $region17: #{tpu_custom_call.1} parent=1 // pred_fallthru
      _
    // Predicated region
    $region18: #{tpu_custom_call.1} parent=1 // pred_check
      _
    $region19: #{tpu_custom_call.1} parent=1 // pred_check_branch
      %33 = sbr.rel (0) target = $region21
    $region20: #{tpu_custom_call.1} parent=1 // pred_region
      _
    $region21: #{tpu_custom_call.1} parent=1 // pred_fallthru
      _
    // Predicated region
    $region22: #{tpu_custom_call.1} parent=1 // pred_check
      _
    $region23: #{tpu_custom_call.1} parent=1 // pred_check_branch
      %35 = sbr.rel (0) target = $region25
    $region24: #{tpu_custom_call.1} parent=1 // pred_region
      _
    $region25: #{tpu_custom_call.1} parent=1 // pred_fallthru
      _
    // Predicated region
    $region26: #{tpu_custom_call.1} parent=1 // pred_check
      _
    $region27: #{tpu_custom_call.1} parent=1 // pred_check_branch
      %37 = sbr.rel (0) target = $region29
    $region28: #{tpu_custom_call.1} parent=1 // pred_region
      _
    $region29: #{tpu_custom_call.1} parent=1 // pred_fallthru
      _
    // Predicated region
    $region30: #{tpu_custom_call.1} parent=1 // pred_check
      _
    $region31: #{tpu_custom_call.1} parent=1 // pred_check_branch
      %39 = sbr.rel (0) target = $region33
    $region32: #{tpu_custom_call.1} parent=1 // pred_region
      _
    $region33: #{tpu_custom_call.1} parent=1 // pred_fallthru
      _
    // Predicated region
    $region34: #{tpu_custom_call.1} parent=1 // pred_check
      _
    $region35: #{tpu_custom_call.1} parent=1 // pred_check_branch
      %41 = sbr.rel (0) target = $region37
    $region36: #{tpu_custom_call.1} parent=1 // pred_region
      _
    $region37: #{tpu_custom_call.1} parent=1 // pred_fallthru
      _
    // Predicated region
    $region38: #{tpu_custom_call.1} parent=1 // pred_check
      _
    $region39: #{tpu_custom_call.1} parent=1 // pred_check_branch
      %43 = sbr.rel (0) target = $region41
    $region40: #{tpu_custom_call.1} parent=1 // pred_region
      _
    $region41: #{tpu_custom_call.1} parent=1 // pred_fallthru
      _
    // Predicated region
    $region42: #{tpu_custom_call.1} parent=1 // pred_check
      _
    $region43: #{tpu_custom_call.1} parent=1 // pred_check_branch
      %45 = sbr.rel (0) target = $region45
    $region44: #{tpu_custom_call.1} parent=1 // pred_region
      _
    $region45: #{tpu_custom_call.1} parent=1 // pred_fallthru
      _
    // Predicated region
    $region46: #{tpu_custom_call.1} parent=1 // pred_check
      _
    $region47: #{tpu_custom_call.1} parent=1 // pred_check_branch
      %47 = sbr.rel (0) target = $region49
    $region48: #{tpu_custom_call.1} parent=1 // pred_region
      _
    $region49: #{tpu_custom_call.1} parent=1 // pred_fallthru
      _
    // Predicated region
    $region50: #{tpu_custom_call.1} parent=1 // pred_check
      _
    $region51: #{tpu_custom_call.1} parent=1 // pred_check_branch
      %49 = sbr.rel (0) target = $region53
    $region52: #{tpu_custom_call.1} parent=1 // pred_region
      _
    $region53: #{tpu_custom_call.1} parent=1 // pred_fallthru
      _
    // Predicated region
    $region54: #{tpu_custom_call.1} parent=1 // pred_check
      _
    $region55: #{tpu_custom_call.1} parent=1 // pred_check_branch
      %51 = sbr.rel (0) target = $region57
    $region56: #{tpu_custom_call.1} parent=1 // pred_region
      _
    $region57: #{tpu_custom_call.1} parent=1 // pred_fallthru
      _
    // Predicated region
    $region58: #{tpu_custom_call.1} parent=1 // pred_check
      _
    $region59: #{tpu_custom_call.1} parent=1 // pred_check_branch
      %53 = sbr.rel (0) target = $region61
    $region60: #{tpu_custom_call.1} parent=1 // pred_region
      _
    $region61: #{tpu_custom_call.1} parent=1 // pred_fallthru
      _
    %v55 = vld [vmem:[%s0] sm:$0xff]
    %v56 = vld [vmem:[%s0 + $0x8] sm:$0xff]
    %v57 = vld [vmem:[%s1] sm:$0xf]
    %v58 = vld [vmem:[%s1 + $0x4] sm:$0xf]
    %v59 = vld [vmem:[%s1 + $0x8] sm:$0xf]
    %v60 = vld [vmem:[%s1 + $0xc] sm:$0xf]
    %v61 = vld [vmem:[%s1 + $0x10] sm:$0xf]
    %v62 = vld [vmem:[%s1 + $0x14] sm:$0xf]
    %v63 = vld [vmem:[%s1 + $0x18] sm:$0xf]
    %v64 = vld [vmem:[%s1 + $0x1c] sm:$0xf]
    %v65 = vld [vmem:[%s1 + $0x20] sm:$0xf]
    %v66 = vld [vmem:[%s1 + $0x24] sm:$0xf]
    %v67 = vld [vmem:[%s1 + $0x28] sm:$0xf]
    %v68 = vld [vmem:[%s1 + $0x2c] sm:$0xf]
    %v69 = vld [vmem:[%s1 + $0x30] sm:$0xf]
    %v70 = vld [vmem:[%s1 + $0x34] sm:$0xf]
    %v71 = vld [vmem:[%s1 + $0x38] sm:$0xf]
    %v72 = vld [vmem:[%s1 + $0x3c] sm:$0xf]
    %v73 = vld [vmem:[%s1 + $0x40] sm:$0xf]
    %v74 = vld [vmem:[%s1 + $0x44] sm:$0xf]
    %v75 = vld [vmem:[%s1 + $0x48] sm:$0xf]
    %v76 = vld [vmem:[%s1 + $0x4c] sm:$0xf]
    %v77 = vld [vmem:[%s1 + $0x50] sm:$0xf]
    %v78 = vld [vmem:[%s1 + $0x54] sm:$0xf]
    %v79 = vld [vmem:[%s1 + $0x58] sm:$0xf]
    %v80 = vld [vmem:[%s1 + $0x5c] sm:$0xf]
    %v81 = vld [vmem:[%s1 + $0x60] sm:$0xf]
    %v82 = vld [vmem:[%s1 + $0x64] sm:$0xf]
    %v83 = vld [vmem:[%s1 + $0x68] sm:$0xf]
    %v84 = vld [vmem:[%s1 + $0x6c] sm:$0xf]
    %v85 = vld [vmem:[%s1 + $0x70] sm:$0xf]
    %v86 = vld [vmem:[%s1 + $0x74] sm:$0xf]
    %v87 = vld [vmem:[%s1 + $0x78] sm:$0xf]
    %v88 = vld [vmem:[%s1 + $0x7c] sm:$0xf]
    %v89 = vld [vmem:[%s2] sm:$0x1]
    %v91 = vlaneseq
    %v92 = vshrl.u32 %v91, 7
    %v93 = vsub.s32 0, %v92
    %v94 = vrot.slane %v89, %v93
    %v98 = vunpack.c.l.b16 %v55
    %v99 = vunpack.c.h.b16 %v55
    %v100 = vunpack.c.l.b16 %v56
    %v101 = vunpack.c.h.b16 %v56
    %v102 = vpack.c.b16 %v100, %v98
    %v103 = vpack.c.b16 %v101, %v99
    %v138 = vunpack.c.l.b16 %v57
    %v139 = vunpack.c.l.b16 %v58
    %v140 = vunpack.c.l.b16 %v59
    %v141 = vunpack.c.l.b16 %v60
    %v142 = vunpack.c.l.b16 %v61
    %v143 = vunpack.c.l.b16 %v62
    %v144 = vunpack.c.l.b16 %v63
    %v145 = vunpack.c.l.b16 %v64
    %v146 = vunpack.c.l.b16 %v65
    %v147 = vunpack.c.l.b16 %v66
    %v148 = vunpack.c.l.b16 %v67
    %v149 = vunpack.c.l.b16 %v68
    %v150 = vunpack.c.l.b16 %v69
    %v151 = vunpack.c.l.b16 %v70
    %v152 = vunpack.c.l.b16 %v71
    %v153 = vunpack.c.l.b16 %v72
    %v154 = vunpack.c.l.b16 %v73
    %v155 = vunpack.c.l.b16 %v74
    %v156 = vunpack.c.l.b16 %v75
    %v157 = vunpack.c.l.b16 %v76
    %v158 = vunpack.c.l.b16 %v77
    %v159 = vunpack.c.l.b16 %v78
    %v160 = vunpack.c.l.b16 %v79
    %v161 = vunpack.c.l.b16 %v80
    %v162 = vunpack.c.l.b16 %v81
    %v163 = vunpack.c.l.b16 %v82
    %v164 = vunpack.c.l.b16 %v83
    %v165 = vunpack.c.l.b16 %v84
    %v166 = vunpack.c.l.b16 %v85
    %v167 = vunpack.c.l.b16 %v86
    %v168 = vunpack.c.l.b16 %v87
    %v169 = vunpack.c.l.b16 %v88
    %v170 = vpack.c.b16 %v139, %v138
    %v171 = vpack.c.b16 %v141, %v140
    %v172 = vpack.c.b16 %v143, %v142
    %v173 = vpack.c.b16 %v145, %v144
    %v174 = vpack.c.b16 %v147, %v146
    %v175 = vpack.c.b16 %v149, %v148
    %v176 = vpack.c.b16 %v151, %v150
    %v177 = vpack.c.b16 %v153, %v152
    %v178 = vpack.c.b16 %v155, %v154
    %v179 = vpack.c.b16 %v157, %v156
    %v180 = vpack.c.b16 %v159, %v158
    %v181 = vpack.c.b16 %v161, %v160
    %v182 = vpack.c.b16 %v163, %v162
    %v183 = vpack.c.b16 %v165, %v164
    %v184 = vpack.c.b16 %v167, %v166
    %v185 = vpack.c.b16 %v169, %v168
    %202 = vmatprep.subr.bf16.mxu0 0
    %203 = vmatpush1.bf16.msra.mxu0 %v170
    %204 = vmatprep.subr.bf16.mxu0 0
    %205 = vmatpush1.bf16.msra.mxu0 %v171
    %206 = vmatprep.subr.bf16.mxu0 0
    %207 = vmatpush1.bf16.msra.mxu0 %v172
    %208 = vmatprep.subr.bf16.mxu0 0
    %209 = vmatpush1.bf16.msra.mxu0 %v173
    %210 = vmatprep.subr.bf16.mxu0 0
    %211 = vmatpush1.bf16.msra.mxu0 %v174
    %212 = vmatprep.subr.bf16.mxu0 0
    %213 = vmatpush1.bf16.msra.mxu0 %v175
    %214 = vmatprep.subr.bf16.mxu0 0
    %215 = vmatpush1.bf16.msra.mxu0 %v176
    %216 = vmatprep.subr.bf16.mxu0 0
    %217 = vmatpush1.bf16.msra.mxu0 %v177
    %218 = vmatprep.subr.bf16.mxu0 0
    %219 = vmatpush1.bf16.msra.mxu0 %v178
    %220 = vmatprep.subr.bf16.mxu0 0
    %221 = vmatpush1.bf16.msra.mxu0 %v179
    %222 = vmatprep.subr.bf16.mxu0 0
    %223 = vmatpush1.bf16.msra.mxu0 %v180
    %224 = vmatprep.subr.bf16.mxu0 0
    %225 = vmatpush1.bf16.msra.mxu0 %v181
    %226 = vmatprep.subr.bf16.mxu0 0
    %227 = vmatpush1.bf16.msra.mxu0 %v182
    %228 = vmatprep.subr.bf16.mxu0 0
    %229 = vmatpush1.bf16.msra.mxu0 %v183
    %230 = vmatprep.subr.bf16.mxu0 0
    %231 = vmatpush1.bf16.msra.mxu0 %v184
    %232 = vmatprep.subr.bf16.mxu0 0
    %233 = vmatpush1.bf16.msra.mxu0 %v185
    %234 = vmatprep.mubr.bf16.mxu0 %v103
    %235 = vmatmul.mubr.bf16.gmra.mrb[0].mxu0 %v102
    %v236 = vpop.f32.mrb[0].mxu0
    %v237 = vadd.f32 %v94, %v236
    %v238 = vpop.f32.mrb[0].mxu0
    %v239 = vpop.f32.mrb[0].mxu0
    %v240 = vadd.f32 %v94, %v239
    %v241 = vpop.f32.mrb[0].mxu0
    %242 = vdwg.mxu0
    %v243 = vld [vmem:[%s3] sm:$0x1]
    %v244 = vld [vmem:[%s4] sm:$0x1]
    %vm245 = vcmask 523264
    %v246 = vsel %vm245, %v237, 0.0
    %247 = vadd.xlane.f32.xlu0 %v246
    %v248 = vpop.xlane.xlu0 %247
    %v249 = vsel %vm245, %v240, 0.0
    %250 = vadd.xlane.f32.xlu0 %v249
    %v251 = vpop.xlane.xlu0 %250
    %v252 = vrcp.pop 64.0
    %v253 = vmul.f32 %v248, %v252
    %v254 = vmul.f32 %v251, %v252
    %v255 = vsub.f32 %v237, %v253
    %v256 = vsub.f32 %v240, %v254
    %v257 = vmul.f32 %v255, %v255
    %v258 = vmul.f32 %v256, %v256
    %v259 = vsel %vm245, %v257, 0.0
    %260 = vadd.xlane.f32.xlu0 %v259
    %v261 = vpop.xlane.xlu0 %260
    %v262 = vsel %vm245, %v258, 0.0
    %263 = vadd.xlane.f32.xlu0 %v262
    %v264 = vpop.xlane.xlu0 %263
    %v265 = vmul.f32 %v261, %v252
    %v266 = vmul.f32 %v264, %v252
    %v267 = vadd.f32 %v265, 1e-05
    %v268 = vadd.f32 %v266, 1e-05
    %v269 = vrsqrt.pop %v267
    %v270 = vrsqrt.pop %v268
    %v271 = vmul.f32 %v255, %v269
    %v272 = vmul.f32 %v256, %v270
    %v274 = vlaneseq
    %v275 = vshrl.u32 %v274, 7
    %v276 = vsub.s32 0, %v275
    %v277 = vrot.slane %v243, %v276
    %v279 = vmul.f32 %v271, %v277
    %v280 = vmul.f32 %v272, %v277
    %v282 = vlaneseq
    %v283 = vshrl.u32 %v282, 7
    %v284 = vsub.s32 0, %v283
    %v285 = vrot.slane %v244, %v284
    %v287 = vadd.f32 %v279, %v285
    %v288 = vadd.f32 %v280, %v285
    %vm289 = vcmp.ge.f32.partialorder %v287, 0.0
    %vm290 = vcmp.ge.f32.partialorder %v288, 0.0
    %v291 = vmul.f32 %v287, 0.01
    %v292 = vmul.f32 %v288, 0.01
    %v293 = vsel %vm289, %v287, %v291
    %v294 = vsel %vm290, %v288, %v292
    %v295 = vpack.c.bf16 %v294, %v293
    %v296 = vld [vmem:[%s5] sm:$0xf]
    %v297 = vld [vmem:[%s5 + $0x4] sm:$0xf]
    %v298 = vld [vmem:[%s5 + $0x8] sm:$0xf]
    %v299 = vld [vmem:[%s5 + $0xc] sm:$0xf]
    %v300 = vld [vmem:[%s5 + $0x10] sm:$0xf]
    %v301 = vld [vmem:[%s5 + $0x14] sm:$0xf]
    %v302 = vld [vmem:[%s5 + $0x18] sm:$0xf]
    %v303 = vld [vmem:[%s5 + $0x1c] sm:$0xf]
    %v304 = vld [vmem:[%s6] sm:$0x1]
    %v306 = vlaneseq
    %v307 = vshrl.u32 %v306, 7
    %v308 = vsub.s32 0, %v307
    %v309 = vrot.slane %v304, %v308
    %v319 = vunpack.c.l.b16 %v296
    %v320 = vunpack.c.l.b16 %v297
    %v321 = vunpack.c.l.b16 %v298
    %v322 = vunpack.c.l.b16 %v299
    %v323 = vunpack.c.l.b16 %v300
    %v324 = vunpack.c.l.b16 %v301
    %v325 = vunpack.c.l.b16 %v302
    %v326 = vunpack.c.l.b16 %v303
    %v327 = vpack.c.b16 %v320, %v319
    %v328 = vpack.c.b16 %v322, %v321
    %v329 = vpack.c.b16 %v324, %v323
    %v330 = vpack.c.b16 %v326, %v325
    %v336 = vsel %vm245, %v295, 0
    %338 = vmatprep.subr.bf16.mxu0 0
    %339 = vmatpush1.bf16.msra.mxu0 %v327
    %340 = vmatprep.subr.bf16.mxu0 0
    %341 = vmatpush1.bf16.msra.mxu0 %v328
    %342 = vmatprep.subr.bf16.mxu0 0
    %343 = vmatpush1.bf16.msra.mxu0 %v329
    %344 = vmatprep.subr.bf16.mxu0 0
    %345 = vmatpush1.bf16.msra.mxu0 %v330
    %346 = vmatprep.subr.bf16.mxu0 0
    %347 = vmatpush1.bf16.msra.mxu0 0
    %348 = vmatprep.subr.bf16.mxu0 0
    %349 = vmatpush1.bf16.msra.mxu0 0
    %350 = vmatprep.subr.bf16.mxu0 0
    %351 = vmatpush1.bf16.msra.mxu0 0
    %352 = vmatprep.subr.bf16.mxu0 0
    %353 = vmatpush1.bf16.msra.mxu0 0
    %354 = vmatprep.subr.bf16.mxu0 0
    %355 = vmatpush1.bf16.msra.mxu0 0
    %356 = vmatprep.subr.bf16.mxu0 0
    %357 = vmatpush1.bf16.msra.mxu0 0
    %358 = vmatprep.subr.bf16.mxu0 0
    %359 = vmatpush1.bf16.msra.mxu0 0
    %360 = vmatprep.subr.bf16.mxu0 0
    %361 = vmatpush1.bf16.msra.mxu0 0
    %362 = vmatprep.subr.bf16.mxu0 0
    %363 = vmatpush1.bf16.msra.mxu0 0
    %364 = vmatprep.subr.bf16.mxu0 0
    %365 = vmatpush1.bf16.msra.mxu0 0
    %366 = vmatprep.subr.bf16.mxu0 0
    %367 = vmatpush1.bf16.msra.mxu0 0
    %368 = vmatprep.subr.bf16.mxu0 0
    %369 = vmatpush1.bf16.msra.mxu0 0
    %370 = vmatprep.mubr.bf16.mxu0 0
    %371 = vmatmul.mubr.bf16.gmra.mrb[0].mxu0 %v336
    %v372 = vpop.f32.mrb[0].mxu0
    %v373 = vadd.f32 %v309, %v372
    %v374 = vpop.f32.mrb[0].mxu0
    %v375 = vpop.f32.mrb[0].mxu0
    %v376 = vadd.f32 %v309, %v375
    %v377 = vpop.f32.mrb[0].mxu0
    %378 = vdwg.mxu0
    %v379 = vpack.c.bf16 %v376, %v373
    %v380 = vld [vmem:[%s7] sm:$0xf]
    %v381 = vld [vmem:[%s7 + $0x4] sm:$0xf]
    %v382 = vld [vmem:[%s7 + $0x8] sm:$0xf]
    %v383 = vld [vmem:[%s7 + $0xc] sm:$0xf]
    %v384 = vld [vmem:[%s8] sm:$0x1]
    %v386 = vlaneseq
    %v387 = vshrl.u32 %v386, 7
    %v388 = vsub.s32 0, %v387
    %v389 = vrot.slane %v384, %v388
    %v395 = vunpack.c.l.b16 %v380
    %v396 = vunpack.c.l.b16 %v381
    %v397 = vunpack.c.l.b16 %v382
    %v398 = vunpack.c.l.b16 %v383
    %v399 = vpack.c.b16 %v396, %v395
    %v400 = vpack.c.b16 %v398, %v397
    %vm403 = vcmask 261120
    %v405 = vsel %vm403, %v379, 0
    %407 = vmatprep.subr.bf16.mxu0 0
    %408 = vmatpush1.bf16.msra.mxu0 %v399
    %409 = vmatprep.subr.bf16.mxu0 0
    %410 = vmatpush1.bf16.msra.mxu0 %v400
    %411 = vmatprep.subr.bf16.mxu0 0
    %412 = vmatpush1.bf16.msra.mxu0 0
    %413 = vmatprep.subr.bf16.mxu0 0
    %414 = vmatpush1.bf16.msra.mxu0 0
    %415 = vmatprep.subr.bf16.mxu0 0
    %416 = vmatpush1.bf16.msra.mxu0 0
    %417 = vmatprep.subr.bf16.mxu0 0
    %418 = vmatpush1.bf16.msra.mxu0 0
    %419 = vmatprep.subr.bf16.mxu0 0
    %420 = vmatpush1.bf16.msra.mxu0 0
    %421 = vmatprep.subr.bf16.mxu0 0
    %422 = vmatpush1.bf16.msra.mxu0 0
    %423 = vmatprep.subr.bf16.mxu0 0
    %424 = vmatpush1.bf16.msra.mxu0 0
    %425 = vmatprep.subr.bf16.mxu0 0
    %426 = vmatpush1.bf16.msra.mxu0 0
    %427 = vmatprep.subr.bf16.mxu0 0
    %428 = vmatpush1.bf16.msra.mxu0 0
    %429 = vmatprep.subr.bf16.mxu0 0
    %430 = vmatpush1.bf16.msra.mxu0 0
    %431 = vmatprep.subr.bf16.mxu0 0
    %432 = vmatpush1.bf16.msra.mxu0 0
    %433 = vmatprep.subr.bf16.mxu0 0
    %434 = vmatpush1.bf16.msra.mxu0 0
    %435 = vmatprep.subr.bf16.mxu0 0
    %436 = vmatpush1.bf16.msra.mxu0 0
    %437 = vmatprep.subr.bf16.mxu0 0
    %438 = vmatpush1.bf16.msra.mxu0 0
    %439 = vmatprep.mubr.bf16.mxu0 0
    %440 = vmatmul.mubr.bf16.gmra.mrb[0].mxu0 %v405
    %v441 = vpop.f32.mrb[0].mxu0
    %v442 = vadd.f32 %v389, %v441
    %v443 = vpop.f32.mrb[0].mxu0
    %v444 = vpop.f32.mrb[0].mxu0
    %v445 = vadd.f32 %v389, %v444
    %v446 = vpop.f32.mrb[0].mxu0
    %447 = vdwg.mxu0
    %v448 = vpack.c.bf16 %v445, %v442
    %v449 = vld [vmem:[%s9] sm:$0xf]
    %v450 = vld [vmem:[%s9 + $0x4] sm:$0xf]
    %v451 = vld [vmem:[%s9 + $0x8] sm:$0xf]
    %v452 = vld [vmem:[%s9 + $0xc] sm:$0xf]
    %v453 = vld [vmem:[%s9 + $0x10] sm:$0xf]
    %v454 = vld [vmem:[%s9 + $0x14] sm:$0xf]
    %v455 = vld [vmem:[%s9 + $0x18] sm:$0xf]
    %v456 = vld [vmem:[%s9 + $0x1c] sm:$0xf]
    %v457 = vld [vmem:[%s9 + $0x20] sm:$0xf]
    %v458 = vld [vmem:[%s9 + $0x24] sm:$0xf]
    %v459 = vld [vmem:[%s9 + $0x28] sm:$0xf]
    %v460 = vld [vmem:[%s9 + $0x2c] sm:$0xf]
    %v461 = vld [vmem:[%s9 + $0x30] sm:$0xf]
    %v462 = vld [vmem:[%s9 + $0x34] sm:$0xf]
    %v463 = vld [vmem:[%s9 + $0x38] sm:$0xf]
    %v464 = vld [vmem:[%s9 + $0x3c] sm:$0xf]
    %v465 = vld [vmem:[%s10] sm:$0x1]
    %v467 = vlaneseq
    %v468 = vshrl.u32 %v467, 7
    %v469 = vsub.s32 0, %v468
    %v470 = vrot.slane %v465, %v469
    %v488 = vunpack.c.l.b16 %v449
    %v489 = vunpack.c.l.b16 %v450
    %v490 = vunpack.c.l.b16 %v451
    %v491 = vunpack.c.l.b16 %v452
    %v492 = vunpack.c.l.b16 %v453
    %v493 = vunpack.c.l.b16 %v454
    %v494 = vunpack.c.l.b16 %v455
    %v495 = vunpack.c.l.b16 %v456
    %v496 = vunpack.c.l.b16 %v457
    %v497 = vunpack.c.l.b16 %v458
    %v498 = vunpack.c.l.b16 %v459
    %v499 = vunpack.c.l.b16 %v460
    %v500 = vunpack.c.l.b16 %v461
    %v501 = vunpack.c.l.b16 %v462
    %v502 = vunpack.c.l.b16 %v463
    %v503 = vunpack.c.l.b16 %v464
    %v504 = vpack.c.b16 %v489, %v488
    %v505 = vpack.c.b16 %v491, %v490
    %v506 = vpack.c.b16 %v493, %v492
    %v507 = vpack.c.b16 %v495, %v494
    %v508 = vpack.c.b16 %v497, %v496
    %v509 = vpack.c.b16 %v499, %v498
    %v510 = vpack.c.b16 %v501, %v500
    %v511 = vpack.c.b16 %v503, %v502
    %520 = vmatprep.subr.bf16.mxu0 0
    %521 = vmatpush1.bf16.msra.mxu0 %v504
    %522 = vmatprep.subr.bf16.mxu0 0
    %523 = vmatpush1.bf16.msra.mxu0 %v505
    %524 = vmatprep.subr.bf16.mxu0 0
    %525 = vmatpush1.bf16.msra.mxu0 %v506
    %526 = vmatprep.subr.bf16.mxu0 0
    %527 = vmatpush1.bf16.msra.mxu0 %v507
    %528 = vmatprep.subr.bf16.mxu0 0
    %529 = vmatpush1.bf16.msra.mxu0 %v508
    %530 = vmatprep.subr.bf16.mxu0 0
    %531 = vmatpush1.bf16.msra.mxu0 %v509
    %532 = vmatprep.subr.bf16.mxu0 0
    %533 = vmatpush1.bf16.msra.mxu0 %v510
    %534 = vmatprep.subr.bf16.mxu0 0
    %535 = vmatpush1.bf16.msra.mxu0 %v511
    %536 = vmatprep.subr.bf16.mxu0 0
    %537 = vmatpush1.bf16.msra.mxu0 0
    %538 = vmatprep.subr.bf16.mxu0 0
    %539 = vmatpush1.bf16.msra.mxu0 0
    %540 = vmatprep.subr.bf16.mxu0 0
    %541 = vmatpush1.bf16.msra.mxu0 0
    %542 = vmatprep.subr.bf16.mxu0 0
    %543 = vmatpush1.bf16.msra.mxu0 0
    %544 = vmatprep.subr.bf16.mxu0 0
    %545 = vmatpush1.bf16.msra.mxu0 0
    %546 = vmatprep.subr.bf16.mxu0 0
    %547 = vmatpush1.bf16.msra.mxu0 0
    %548 = vmatprep.subr.bf16.mxu0 0
    %549 = vmatpush1.bf16.msra.mxu0 0
    %550 = vmatprep.subr.bf16.mxu0 0
    %551 = vmatpush1.bf16.msra.mxu0 0
    %552 = vmatprep.mubr.bf16.mxu0 0
    %553 = vmatmul.mubr.bf16.gmra.mrb[0].mxu0 %v448
    %v554 = vpop.f32.mrb[0].mxu0
    %v555 = vadd.f32 %v470, %v554
    %v556 = vpop.f32.mrb[0].mxu0
    %v557 = vpop.f32.mrb[0].mxu0
    %v558 = vadd.f32 %v470, %v557
    %v559 = vpop.f32.mrb[0].mxu0
    %560 = vdwg.mxu0
    %v561 = vld [vmem:[%s11] sm:$0x1]
    %v562 = vld [vmem:[%s12] sm:$0x1]
    %v563 = vsel %vm245, %v555, 0.0
    %564 = vadd.xlane.f32.xlu0 %v563
    %v565 = vpop.xlane.xlu0 %564
    %v566 = vsel %vm245, %v558, 0.0
    %567 = vadd.xlane.f32.xlu0 %v566
    %v568 = vpop.xlane.xlu0 %567
    %v569 = vmul.f32 %v565, %v252
    %v570 = vmul.f32 %v568, %v252
    %v571 = vsub.f32 %v555, %v569
    %v572 = vsub.f32 %v558, %v570
    %v573 = vmul.f32 %v571, %v571
    %v574 = vmul.f32 %v572, %v572
    %v575 = vsel %vm245, %v573, 0.0
    %576 = vadd.xlane.f32.xlu0 %v575
    %v577 = vpop.xlane.xlu0 %576
    %v578 = vsel %vm245, %v574, 0.0
    %579 = vadd.xlane.f32.xlu0 %v578
    %v580 = vpop.xlane.xlu0 %579
    %v581 = vmul.f32 %v577, %v252
    %v582 = vmul.f32 %v580, %v252
    %v583 = vadd.f32 %v581, 1e-05
    %v584 = vadd.f32 %v582, 1e-05
    %v585 = vrsqrt.pop %v583
    %v586 = vrsqrt.pop %v584
    %v587 = vmul.f32 %v571, %v585
    %v588 = vmul.f32 %v572, %v586
    %v590 = vlaneseq
    %v591 = vshrl.u32 %v590, 7
    %v592 = vsub.s32 0, %v591
    %v593 = vrot.slane %v561, %v592
    %v595 = vmul.f32 %v587, %v593
    %v596 = vmul.f32 %v588, %v593
    %v598 = vlaneseq
    %v599 = vshrl.u32 %v598, 7
    %v600 = vsub.s32 0, %v599
    %v601 = vrot.slane %v562, %v600
    %v603 = vadd.f32 %v595, %v601
    %v604 = vadd.f32 %v596, %v601
    %vm605 = vcmp.ge.f32.partialorder %v603, 0.0
    %vm606 = vcmp.ge.f32.partialorder %v604, 0.0
    %v607 = vmul.f32 %v603, 0.01
    %v608 = vmul.f32 %v604, 0.01
    %v609 = vsel %vm605, %v603, %v607
    %v610 = vsel %vm606, %v604, %v608
    %v611 = vpack.c.bf16 %v610, %v609
    %v612 = vld [vmem:[%s13] sm:$0xff]
    %v613 = vld [vmem:[%s13 + $0x8] sm:$0xff]
    %v614 = vld [vmem:[%s13 + $0x10] sm:$0xff]
    %v615 = vld [vmem:[%s13 + $0x18] sm:$0xff]
    %v616 = vld [vmem:[%s13 + $0x20] sm:$0xff]
    %v617 = vld [vmem:[%s13 + $0x28] sm:$0xff]
    %v618 = vld [vmem:[%s13 + $0x30] sm:$0xff]
    %v619 = vld [vmem:[%s13 + $0x38] sm:$0xff]
    %v620 = vld [vmem:[%s14] sm:$0x3]
    %v622 = vlaneseq
    %v623 = vshrl.u32 %v622, 7
    %v624 = vsub.s32 0, %v623
    %v625 = vrot.slane %v620, %v624
    %v626 = vlaneseq
    %v627 = vshrl.u32 %v626, 7
    %v628 = vsub.s32 1, %v627
    %v629 = vrot.slane %v620, %v628
    %v640 = vunpack.c.l.b16 %v612
    %v641 = vunpack.c.h.b16 %v612
    %v642 = vunpack.c.l.b16 %v613
    %v643 = vunpack.c.h.b16 %v613
    %v644 = vunpack.c.l.b16 %v614
    %v645 = vunpack.c.h.b16 %v614
    %v646 = vunpack.c.l.b16 %v615
    %v647 = vunpack.c.h.b16 %v615
    %v648 = vunpack.c.l.b16 %v616
    %v649 = vunpack.c.h.b16 %v616
    %v650 = vunpack.c.l.b16 %v617
    %v651 = vunpack.c.h.b16 %v617
    %v652 = vunpack.c.l.b16 %v618
    %v653 = vunpack.c.h.b16 %v618
    %v654 = vunpack.c.l.b16 %v619
    %v655 = vunpack.c.h.b16 %v619
    %v656 = vpack.c.b16 %v642, %v640
    %v657 = vpack.c.b16 %v643, %v641
    %v658 = vpack.c.b16 %v646, %v644
    %v659 = vpack.c.b16 %v647, %v645
    %v660 = vpack.c.b16 %v650, %v648
    %v661 = vpack.c.b16 %v651, %v649
    %v662 = vpack.c.b16 %v654, %v652
    %v663 = vpack.c.b16 %v655, %v653
    %v673 = vsel %vm245, %v611, 0
    %675 = vmatprep.subr.bf16.mxu0 %v657
    %676 = vmatpush1.bf16.msra.mxu0 %v656
    %677 = vmatprep.subr.bf16.mxu0 %v659
    %678 = vmatpush1.bf16.msra.mxu0 %v658
    %679 = vmatprep.subr.bf16.mxu0 %v661
    %680 = vmatpush1.bf16.msra.mxu0 %v660
    %681 = vmatprep.subr.bf16.mxu0 %v663
    %682 = vmatpush1.bf16.msra.mxu0 %v662
    %683 = vmatprep.subr.bf16.mxu0 0
    %684 = vmatpush1.bf16.msra.mxu0 0
    %685 = vmatprep.subr.bf16.mxu0 0
    %686 = vmatpush1.bf16.msra.mxu0 0
    %687 = vmatprep.subr.bf16.mxu0 0
    %688 = vmatpush1.bf16.msra.mxu0 0
    %689 = vmatprep.subr.bf16.mxu0 0
    %690 = vmatpush1.bf16.msra.mxu0 0
    %691 = vmatprep.subr.bf16.mxu0 0
    %692 = vmatpush1.bf16.msra.mxu0 0
    %693 = vmatprep.subr.bf16.mxu0 0
    %694 = vmatpush1.bf16.msra.mxu0 0
    %695 = vmatprep.subr.bf16.mxu0 0
    %696 = vmatpush1.bf16.msra.mxu0 0
    %697 = vmatprep.subr.bf16.mxu0 0
    %698 = vmatpush1.bf16.msra.mxu0 0
    %699 = vmatprep.subr.bf16.mxu0 0
    %700 = vmatpush1.bf16.msra.mxu0 0
    %701 = vmatprep.subr.bf16.mxu0 0
    %702 = vmatpush1.bf16.msra.mxu0 0
    %703 = vmatprep.subr.bf16.mxu0 0
    %704 = vmatpush1.bf16.msra.mxu0 0
    %705 = vmatprep.subr.bf16.mxu0 0
    %706 = vmatpush1.bf16.msra.mxu0 0
    %707 = vmatprep.mubr.bf16.mxu0 0
    %708 = vmatmul.mubr.bf16.gmra.mrb[0].mxu0 %v673
    %v709 = vpop.f32.mrb[0].mxu0
    %v710 = vadd.f32 %v625, %v709
    %v711 = vpop.f32.mrb[0].mxu0
    %v712 = vadd.f32 %v629, %v711
    %v713 = vpop.f32.mrb[0].mxu0
    %v714 = vadd.f32 %v625, %v713
    %v715 = vpop.f32.mrb[0].mxu0
    %v716 = vadd.f32 %v629, %v715
    %717 = vdwg.mxu0
    %v718 = vsub.f32 0.0, %v710
    %v719 = vsub.f32 0.0, %v712
    %v720 = vsub.f32 0.0, %v714
    %v721 = vsub.f32 0.0, %v716
    %v722 = vmul.f32 %v718, 1.442695
    %v723 = vpow.pop %v722
    %v724 = vmul.f32 %v719, 1.442695
    %v725 = vpow.pop %v724
    %v726 = vmul.f32 %v720, 1.442695
    %v727 = vpow.pop %v726
    %v728 = vmul.f32 %v721, 1.442695
    %v729 = vpow.pop %v728
    %v730 = vadd.f32 %v723, 1.0
    %v731 = vadd.f32 %v725, 1.0
    %v732 = vadd.f32 %v727, 1.0
    %v733 = vadd.f32 %v729, 1.0
    %v734 = vrcp.pop %v730
    %v735 = vrcp.pop %v731
    %v736 = vrcp.pop %v732
    %v737 = vrcp.pop %v733
    %v738 = vpack.c.bf16 %v736, %v734
    %v739 = vpack.c.bf16 %v737, %v735
    %v742 = vunpack.c.l.b16 %v738
    %v743 = vunpack.c.l.b16 %v739
    %v744 = vunpack.c.h.b16 %v738
    %v745 = vunpack.c.h.b16 %v739
    %v746 = vpack.c.b16 %v743, %v742
    %v747 = vpack.c.b16 %v745, %v744
    %750 = vst [vmem:[#allocation2] sm:$0xff] %v746
    %751 = vst [vmem:[#allocation2 + $0x8] sm:$0xff] %v747
    %752 = vst [vmem:[#allocation4] sm:$0xff] %v442
    %753 = vst [vmem:[#allocation4 + $0x8] sm:$0xff] %v445
    // Predicated region
    $region62: #{tpu_custom_call.1} parent=1 // pred_check
      _
    $region63: #{tpu_custom_call.1} parent=1 // pred_check_branch
      %755 = sbr.rel (0) target = $region65
    $region64: #{tpu_custom_call.1} parent=1 // pred_region
      %s757 = ssub.s32 256, 256
      %758 = vsyncadd [#allocation3], %s757
      %s759 = sshll.u32 [#allocation2], 4
      %s760 = int_to_ptr.vmem [resolvable:$true] %s759
      %765 = dma.vmem_to_hbm [thread:$0]  %s760, 256, %s15, [#allocation3], 128, 128, 8
    $region65: #{tpu_custom_call.1} parent=1 // pred_fallthru
      _
    // Predicated region
    $region66: #{tpu_custom_call.1} parent=1 // pred_check
      _
    $region67: #{tpu_custom_call.1} parent=1 // pred_check_branch
      %767 = sbr.rel (0) target = $region69
    $region68: #{tpu_custom_call.1} parent=1 // pred_region
      %s769 = ssub.s32 256, 256
      %770 = vsyncadd [#allocation5], %s769
      %s771 = sshll.u32 [#allocation4], 4
      %s772 = int_to_ptr.vmem [resolvable:$true] %s771
      %777 = dma.vmem_to_hbm [thread:$0]  %s772, 256, %s16, [#allocation5], 128, 128, 8
    $region69: #{tpu_custom_call.1} parent=1 // pred_fallthru
      _
    // Predicated region
    $region70: #{tpu_custom_call.1} parent=1 // pred_check
      _
    $region71: #{tpu_custom_call.1} parent=1 // pred_check_branch
      %779 = sbr.rel (0) target = $region73
    $region72: #{tpu_custom_call.1} parent=1 // pred_region
      %780 = dma.done [#allocation3], 256
    $region73: #{tpu_custom_call.1} parent=1 // pred_fallthru
      _
    // Predicated region
    $region74: #{tpu_custom_call.1} parent=1 // pred_check
      _
    $region75: #{tpu_custom_call.1} parent=1 // pred_check_branch
      %782 = sbr.rel (0) target = $region77
    $region76: #{tpu_custom_call.1} parent=1 // pred_region
      %783 = dma.done [#allocation5], 256
    $region77: #{tpu_custom_call.1} parent=1 // pred_fallthru
      _
    %784 = vsyncpa [#allocation3], 1
    %785 = vsyncpa [#allocation5], 1

// kernel: tpu_custom_call.1
$region0: #{tpu_custom_call.1}
  #allocation0 [shape = 'u32[]', space=smem, size = 0x4, offset = 0x4, fixed_abs, tag = 'smem constant byte address 0x4 - core index']
  #allocation1 [shape = 'u32[144,128]{1,0:T(1,128)}', space=vmem, size = 0x12000, scoped, tag = 'internal scratch']
  %s0 = inlined_call_operand.vmem [shape: bf16[16,256], index: 0, kind: input, shape index: {}]
  %s1 = inlined_call_operand.vmem [shape: bf16[256,64], index: 1, kind: input, shape index: {}]
  %s2 = inlined_call_operand.vmem [shape: f32[1,64], index: 2, kind: input, shape index: {}]
  %s3 = inlined_call_operand.vmem [shape: f32[1,64], index: 3, kind: input, shape index: {}]
  %s4 = inlined_call_operand.vmem [shape: f32[1,64], index: 4, kind: input, shape index: {}]
  %s5 = inlined_call_operand.vmem [shape: bf16[64,32], index: 5, kind: input, shape index: {}]
  %s6 = inlined_call_operand.vmem [shape: f32[1,32], index: 6, kind: input, shape index: {}]
  %s7 = inlined_call_operand.vmem [shape: bf16[32,128], index: 7, kind: input, shape index: {}]
  %s8 = inlined_call_operand.vmem [shape: f32[1,128], index: 8, kind: input, shape index: {}]
  %s9 = inlined_call_operand.vmem [shape: bf16[128,64], index: 9, kind: input, shape index: {}]
  %s10 = inlined_call_operand.vmem [shape: f32[1,64], index: 10, kind: input, shape index: {}]
  %s11 = inlined_call_operand.vmem [shape: f32[1,64], index: 11, kind: input, shape index: {}]
  %s12 = inlined_call_operand.vmem [shape: f32[1,64], index: 12, kind: input, shape index: {}]
  %s13 = inlined_call_operand.vmem [shape: bf16[64,256], index: 13, kind: input, shape index: {}]
  %s14 = inlined_call_operand.vmem [shape: f32[1,256], index: 14, kind: input, shape index: {}]
  %s15 = inlined_call_operand.hbm [shape: bf16[16,256], index: 15, kind: output, shape index: {0}]
  %s16 = inlined_call_operand.hbm [shape: f32[16,128], index: 16, kind: output, shape index: {1}]
  %17 = xla_tuple %s15, %s16
  %s18 = sld [smem:[#allocation0]]
  $region78: #{tpu_custom_call.1} parent=0
    _
  %s20 = ssub.s32 1, %s18
  %s21 = scalar_select 0, %s20, %s18
  $region1: #{tpu_custom_call.1} parent=0
    #allocation2 [shape = 'u8[8192]{0}', space=vmem, size = 0x2000, scoped, tag = 'output window, operand 0, single buffered']
    #allocation3 [shape = 's32[1]{0}', space=sflag, size = 0x4, scoped, tag = 'scoped memory for tpu_custom_call.1']
    #allocation4 [shape = 'u8[8192]{0}', space=vmem, size = 0x2000, scoped, tag = 'output window, operand 1, single buffered']
    #allocation5 [shape = 's32[1]{0}', space=sflag, size = 0x4, scoped, tag = 'scoped memory for tpu_custom_call.1']
    %22 = vsyncpa [#allocation3], 0
    %23 = vsyncpa [#allocation5], 0
    // Predicated region
    $region2: #{tpu_custom_call.1} parent=1 // pred_check
      _
    $region3: #{tpu_custom_call.1} parent=1 // pred_check_branch
      %25 = sbr.rel (0) target = $region5
    $region4: #{tpu_custom_call.1} parent=1 // pred_region
      _
    $region5: #{tpu_custom_call.1} parent=1 // pred_fallthru
      _
    // Predicated region
    $region6: #{tpu_custom_call.1} parent=1 // pred_check
      _
    $region7: #{tpu_custom_call.1} parent=1 // pred_check_branch
      %27 = sbr.rel (0) target = $region9
    $region8: #{tpu_custom_call.1} parent=1 // pred_region
      _
    $region9: #{tpu_custom_call.1} parent=1 // pred_fallthru
      _
    // Predicated region
    $region10: #{tpu_custom_call.1} parent=1 // pred_check
      _
    $region11: #{tpu_custom_call.1} parent=1 // pred_check_branch
      %29 = sbr.rel (0) target = $region13
    $region12: #{tpu_custom_call.1} parent=1 // pred_region
      _
    $region13: #{tpu_custom_call.1} parent=1 // pred_fallthru
      _
    // Predicated region
    $region14: #{tpu_custom_call.1} parent=1 // pred_check
      _
    $region15: #{tpu_custom_call.1} parent=1 // pred_check_branch
      %31 = sbr.rel (0) target = $region17
    $region16: #{tpu_custom_call.1} parent=1 // pred_region
      _
    $region17: #{tpu_custom_call.1} parent=1 // pred_fallthru
      _
    // Predicated region
    $region18: #{tpu_custom_call.1} parent=1 // pred_check
      _
    $region19: #{tpu_custom_call.1} parent=1 // pred_check_branch
      %33 = sbr.rel (0) target = $region21
    $region20: #{tpu_custom_call.1} parent=1 // pred_region
      _
    $region21: #{tpu_custom_call.1} parent=1 // pred_fallthru
      _
    // Predicated region
    $region22: #{tpu_custom_call.1} parent=1 // pred_check
      _
    $region23: #{tpu_custom_call.1} parent=1 // pred_check_branch
      %35 = sbr.rel (0) target = $region25
    $region24: #{tpu_custom_call.1} parent=1 // pred_region
      _
    $region25: #{tpu_custom_call.1} parent=1 // pred_fallthru
      _
    // Predicated region
    $region26: #{tpu_custom_call.1} parent=1 // pred_check
      _
    $region27: #{tpu_custom_call.1} parent=1 // pred_check_branch
      %37 = sbr.rel (0) target = $region29
    $region28: #{tpu_custom_call.1} parent=1 // pred_region
      _
    $region29: #{tpu_custom_call.1} parent=1 // pred_fallthru
      _
    // Predicated region
    $region30: #{tpu_custom_call.1} parent=1 // pred_check
      _
    $region31: #{tpu_custom_call.1} parent=1 // pred_check_branch
      %39 = sbr.rel (0) target = $region33
    $region32: #{tpu_custom_call.1} parent=1 // pred_region
      _
    $region33: #{tpu_custom_call.1} parent=1 // pred_fallthru
      _
    // Predicated region
    $region34: #{tpu_custom_call.1} parent=1 // pred_check
      _
    $region35: #{tpu_custom_call.1} parent=1 // pred_check_branch
      %41 = sbr.rel (0) target = $region37
    $region36: #{tpu_custom_call.1} parent=1 // pred_region
      _
    $region37: #{tpu_custom_call.1} parent=1 // pred_fallthru
      _
    // Predicated region
    $region38: #{tpu_custom_call.1} parent=1 // pred_check
      _
    $region39: #{tpu_custom_call.1} parent=1 // pred_check_branch
      %43 = sbr.rel (0) target = $region41
    $region40: #{tpu_custom_call.1} parent=1 // pred_region
      _
    $region41: #{tpu_custom_call.1} parent=1 // pred_fallthru
      _
    // Predicated region
    $region42: #{tpu_custom_call.1} parent=1 // pred_check
      _
    $region43: #{tpu_custom_call.1} parent=1 // pred_check_branch
      %45 = sbr.rel (0) target = $region45
    $region44: #{tpu_custom_call.1} parent=1 // pred_region
      _
    $region45: #{tpu_custom_call.1} parent=1 // pred_fallthru
      _
    // Predicated region
    $region46: #{tpu_custom_call.1} parent=1 // pred_check
      _
    $region47: #{tpu_custom_call.1} parent=1 // pred_check_branch
      %47 = sbr.rel (0) target = $region49
    $region48: #{tpu_custom_call.1} parent=1 // pred_region
      _
    $region49: #{tpu_custom_call.1} parent=1 // pred_fallthru
      _
    // Predicated region
    $region50: #{tpu_custom_call.1} parent=1 // pred_check
      _
    $region51: #{tpu_custom_call.1} parent=1 // pred_check_branch
      %49 = sbr.rel (0) target = $region53
    $region52: #{tpu_custom_call.1} parent=1 // pred_region
      _
    $region53: #{tpu_custom_call.1} parent=1 // pred_fallthru
      _
    // Predicated region
    $region54: #{tpu_custom_call.1} parent=1 // pred_check
      _
    $region55: #{tpu_custom_call.1} parent=1 // pred_check_branch
      %51 = sbr.rel (0) target = $region57
    $region56: #{tpu_custom_call.1} parent=1 // pred_region
      _
    $region57: #{tpu_custom_call.1} parent=1 // pred_fallthru
      _
    // Predicated region
    $region58: #{tpu_custom_call.1} parent=1 // pred_check
      _
    $region59: #{tpu_custom_call.1} parent=1 // pred_check_branch
      %53 = sbr.rel (0) target = $region61
    $region60: #{tpu_custom_call.1} parent=1 // pred_region
      _
    $region61: #{tpu_custom_call.1} parent=1 // pred_fallthru
      _
    %v55 = vld [vmem:[%s0] sm:$0xff]
    %v56 = vld [vmem:[%s0 + $0x8] sm:$0xff]
    %v57 = vld [vmem:[%s1] sm:$0xf]
    %v58 = vld [vmem:[%s1 + $0x4] sm:$0xf]
    %v59 = vld [vmem:[%s1 + $0x8] sm:$0xf]
    %v60 = vld [vmem:[%s1 + $0xc] sm:$0xf]
    %v61 = vld [vmem:[%s1 + $0x10] sm:$0xf]
    %v62 = vld [vmem:[%s1 + $0x14] sm:$0xf]
    %v63 = vld [vmem:[%s1 + $0x18] sm:$0xf]
    %v64 = vld [vmem:[%s1 + $0x1c] sm:$0xf]
    %v65 = vld [vmem:[%s1 + $0x20] sm:$0xf]
    %v66 = vld [vmem:[%s1 + $0x24] sm:$0xf]
    %v67 = vld [vmem:[%s1 + $0x28] sm:$0xf]
    %v68 = vld [vmem:[%s1 + $0x2c] sm:$0xf]
    %v69 = vld [vmem:[%s1 + $0x30] sm:$0xf]
    %v70 = vld [vmem:[%s1 + $0x34] sm:$0xf]
    %v71 = vld [vmem:[%s1 + $0x38] sm:$0xf]
    %v72 = vld [vmem:[%s1 + $0x3c] sm:$0xf]
    %v73 = vld [vmem:[%s1 + $0x40] sm:$0xf]
    %v74 = vld [vmem:[%s1 + $0x44] sm:$0xf]
    %v75 = vld [vmem:[%s1 + $0x48] sm:$0xf]
    %v76 = vld [vmem:[%s1 + $0x4c] sm:$0xf]
    %v77 = vld [vmem:[%s1 + $0x50] sm:$0xf]
    %v78 = vld [vmem:[%s1 + $0x54] sm:$0xf]
    %v79 = vld [vmem:[%s1 + $0x58] sm:$0xf]
    %v80 = vld [vmem:[%s1 + $0x5c] sm:$0xf]
    %v81 = vld [vmem:[%s1 + $0x60] sm:$0xf]
    %v82 = vld [vmem:[%s1 + $0x64] sm:$0xf]
    %v83 = vld [vmem:[%s1 + $0x68] sm:$0xf]
    %v84 = vld [vmem:[%s1 + $0x6c] sm:$0xf]
    %v85 = vld [vmem:[%s1 + $0x70] sm:$0xf]
    %v86 = vld [vmem:[%s1 + $0x74] sm:$0xf]
    %v87 = vld [vmem:[%s1 + $0x78] sm:$0xf]
    %v88 = vld [vmem:[%s1 + $0x7c] sm:$0xf]
    %v89 = vld [vmem:[%s2] sm:$0x1]
    %v91 = vlaneseq
    %v92 = vshrl.u32 %v91, 7
    %v93 = vsub.s32 0, %v92
    %v94 = vrot.slane %v89, %v93
    %v98 = vunpack.c.l.b16 %v55
    %v99 = vunpack.c.h.b16 %v55
    %v100 = vunpack.c.l.b16 %v56
    %v101 = vunpack.c.h.b16 %v56
    %v102 = vpack.c.b16 %v100, %v98
    %v103 = vpack.c.b16 %v101, %v99
    %v138 = vunpack.c.l.b16 %v57
    %v139 = vunpack.c.l.b16 %v58
    %v140 = vunpack.c.l.b16 %v59
    %v141 = vunpack.c.l.b16 %v60
    %v142 = vunpack.c.l.b16 %v61
    %v143 = vunpack.c.l.b16 %v62
    %v144 = vunpack.c.l.b16 %v63
    %v145 = vunpack.c.l.b16 %v64
    %v146 = vunpack.c.l.b16 %v65
    %v147 = vunpack.c.l.b16 %v66
    %v148 = vunpack.c.l.b16 %v67
    %v149 = vunpack.c.l.b16 %v68
    %v150 = vunpack.c.l.b16 %v69
    %v151 = vunpack.c.l.b16 %v70
    %v152 = vunpack.c.l.b16 %v71
    %v153 = vunpack.c.l.b16 %v72
    %v154 = vunpack.c.l.b16 %v73
    %v155 = vunpack.c.l.b16 %v74
    %v156 = vunpack.c.l.b16 %v75
    %v157 = vunpack.c.l.b16 %v76
    %v158 = vunpack.c.l.b16 %v77
    %v159 = vunpack.c.l.b16 %v78
    %v160 = vunpack.c.l.b16 %v79
    %v161 = vunpack.c.l.b16 %v80
    %v162 = vunpack.c.l.b16 %v81
    %v163 = vunpack.c.l.b16 %v82
    %v164 = vunpack.c.l.b16 %v83
    %v165 = vunpack.c.l.b16 %v84
    %v166 = vunpack.c.l.b16 %v85
    %v167 = vunpack.c.l.b16 %v86
    %v168 = vunpack.c.l.b16 %v87
    %v169 = vunpack.c.l.b16 %v88
    %v170 = vpack.c.b16 %v139, %v138
    %v171 = vpack.c.b16 %v141, %v140
    %v172 = vpack.c.b16 %v143, %v142
    %v173 = vpack.c.b16 %v145, %v144
    %v174 = vpack.c.b16 %v147, %v146
    %v175 = vpack.c.b16 %v149, %v148
    %v176 = vpack.c.b16 %v151, %v150
    %v177 = vpack.c.b16 %v153, %v152
    %v178 = vpack.c.b16 %v155, %v154
    %v179 = vpack.c.b16 %v157, %v156
    %v180 = vpack.c.b16 %v159, %v158
    %v181 = vpack.c.b16 %v161, %v160
    %v182 = vpack.c.b16 %v163, %v162
    %v183 = vpack.c.b16 %v165, %v164
    %v184 = vpack.c.b16 %v167, %v166
    %v185 = vpack.c.b16 %v169, %v168
    %202 = vmatprep.subr.bf16.mxu0 0
    %203 = vmatpush1.bf16.msra.mxu0 %v170
    %204 = vmatprep.subr.bf16.mxu0 0
    %205 = vmatpush1.bf16.msra.mxu0 %v171
    %206 = vmatprep.subr.bf16.mxu0 0
    %207 = vmatpush1.bf16.msra.mxu0 %v172
    %208 = vmatprep.subr.bf16.mxu0 0
    %209 = vmatpush1.bf16.msra.mxu0 %v173
    %210 = vmatprep.subr.bf16.mxu0 0
    %211 = vmatpush1.bf16.msra.mxu0 %v174
    %212 = vmatprep.subr.bf16.mxu0 0
    %213 = vmatpush1.bf16.msra.mxu0 %v175
    %214 = vmatprep.subr.bf16.mxu0 0
    %215 = vmatpush1.bf16.msra.mxu0 %v176
    %216 = vmatprep.subr.bf16.mxu0 0
    %217 = vmatpush1.bf16.msra.mxu0 %v177
    %218 = vmatprep.subr.bf16.mxu0 0
    %219 = vmatpush1.bf16.msra.mxu0 %v178
    %220 = vmatprep.subr.bf16.mxu0 0
    %221 = vmatpush1.bf16.msra.mxu0 %v179
    %222 = vmatprep.subr.bf16.mxu0 0
    %223 = vmatpush1.bf16.msra.mxu0 %v180
    %224 = vmatprep.subr.bf16.mxu0 0
    %225 = vmatpush1.bf16.msra.mxu0 %v181
    %226 = vmatprep.subr.bf16.mxu0 0
    %227 = vmatpush1.bf16.msra.mxu0 %v182
    %228 = vmatprep.subr.bf16.mxu0 0
    %229 = vmatpush1.bf16.msra.mxu0 %v183
    %230 = vmatprep.subr.bf16.mxu0 0
    %231 = vmatpush1.bf16.msra.mxu0 %v184
    %232 = vmatprep.subr.bf16.mxu0 0
    %233 = vmatpush1.bf16.msra.mxu0 %v185
    %234 = vmatprep.mubr.bf16.mxu0 %v103
    %235 = vmatmul.mubr.bf16.gmra.mrb[0].mxu0 %v102
    %v236 = vpop.f32.mrb[0].mxu0
    %v237 = vadd.f32 %v94, %v236
    %v238 = vpop.f32.mrb[0].mxu0
    %v239 = vpop.f32.mrb[0].mxu0
    %v240 = vadd.f32 %v94, %v239
    %v241 = vpop.f32.mrb[0].mxu0
    %242 = vdwg.mxu0
    %v243 = vld [vmem:[%s3] sm:$0x1]
    %v244 = vld [vmem:[%s4] sm:$0x1]
    %vm245 = vcmask 523264
    %v246 = vsel %vm245, %v237, 0.0
    %247 = vadd.xlane.f32.xlu0 %v246
    %v248 = vpop.xlane.xlu0 %247
    %v249 = vsel %vm245, %v240, 0.0
    %250 = vadd.xlane.f32.xlu0 %v249
    %v251 = vpop.xlane.xlu0 %250
    %v252 = vrcp.pop 64.0
    %v253 = vmul.f32 %v248, %v252
    %v254 = vmul.f32 %v251, %v252
    %v255 = vsub.f32 %v237, %v253
    %v256 = vsub.f32 %v240, %v254
    %v257 = vmul.f32 %v255, %v255
    %v258 = vmul.f32 %v256, %v256
    %v259 = vsel %vm245, %v257, 0.0
    %260 = vadd.xlane.f32.xlu0 %v259
    %v261 = vpop.xlane.xlu0 %260
    %v262 = vsel %vm245, %v258, 0.0
    %263 = vadd.xlane.f32.xlu0 %v262
    %v264 = vpop.xlane.xlu0 %263
    %v265 = vmul.f32 %v261, %v252
    %v266 = vmul.f32 %v264, %v252
    %v267 = vadd.f32 %v265, 1e-05
    %v268 = vadd.f32 %v266, 1e-05
    %v269 = vrsqrt.pop %v267
    %v270 = vrsqrt.pop %v268
    %v271 = vmul.f32 %v255, %v269
    %v272 = vmul.f32 %v256, %v270
    %v274 = vlaneseq
    %v275 = vshrl.u32 %v274, 7
    %v276 = vsub.s32 0, %v275
    %v277 = vrot.slane %v243, %v276
    %v279 = vmul.f32 %v271, %v277
    %v280 = vmul.f32 %v272, %v277
    %v282 = vlaneseq
    %v283 = vshrl.u32 %v282, 7
    %v284 = vsub.s32 0, %v283
    %v285 = vrot.slane %v244, %v284
    %v287 = vadd.f32 %v279, %v285
    %v288 = vadd.f32 %v280, %v285
    %vm289 = vcmp.ge.f32.partialorder %v287, 0.0
    %vm290 = vcmp.ge.f32.partialorder %v288, 0.0
    %v291 = vmul.f32 %v287, 0.01
    %v292 = vmul.f32 %v288, 0.01
    %v293 = vsel %vm289, %v287, %v291
    %v294 = vsel %vm290, %v288, %v292
    %v295 = vpack.c.bf16 %v294, %v293
    %v296 = vld [vmem:[%s5] sm:$0xf]
    %v297 = vld [vmem:[%s5 + $0x4] sm:$0xf]
    %v298 = vld [vmem:[%s5 + $0x8] sm:$0xf]
    %v299 = vld [vmem:[%s5 + $0xc] sm:$0xf]
    %v300 = vld [vmem:[%s5 + $0x10] sm:$0xf]
    %v301 = vld [vmem:[%s5 + $0x14] sm:$0xf]
    %v302 = vld [vmem:[%s5 + $0x18] sm:$0xf]
    %v303 = vld [vmem:[%s5 + $0x1c] sm:$0xf]
    %v304 = vld [vmem:[%s6] sm:$0x1]
    %v306 = vlaneseq
    %v307 = vshrl.u32 %v306, 7
    %v308 = vsub.s32 0, %v307
    %v309 = vrot.slane %v304, %v308
    %v319 = vunpack.c.l.b16 %v296
    %v320 = vunpack.c.l.b16 %v297
    %v321 = vunpack.c.l.b16 %v298
    %v322 = vunpack.c.l.b16 %v299
    %v323 = vunpack.c.l.b16 %v300
    %v324 = vunpack.c.l.b16 %v301
    %v325 = vunpack.c.l.b16 %v302
    %v326 = vunpack.c.l.b16 %v303
    %v327 = vpack.c.b16 %v320, %v319
    %v328 = vpack.c.b16 %v322, %v321
    %v329 = vpack.c.b16 %v324, %v323
    %v330 = vpack.c.b16 %v326, %v325
    %v336 = vsel %vm245, %v295, 0
    %338 = vmatprep.subr.bf16.mxu0 0
    %339 = vmatpush1.bf16.msra.mxu0 %v327
    %340 = vmatprep.subr.bf16.mxu0 0
    %341 = vmatpush1.bf16.msra.mxu0 %v328
    %342 = vmatprep.subr.bf16.mxu0 0
    %343 = vmatpush1.bf16.msra.mxu0 %v329
    %344 = vmatprep.subr.bf16.mxu0 0
    %345 = vmatpush1.bf16.msra.mxu0 %v330
    %346 = vmatprep.subr.bf16.mxu0 0
    %347 = vmatpush1.bf16.msra.mxu0 0
    %348 = vmatprep.subr.bf16.mxu0 0
    %349 = vmatpush1.bf16.msra.mxu0 0
    %350 = vmatprep.subr.bf16.mxu0 0
    %351 = vmatpush1.bf16.msra.mxu0 0
    %352 = vmatprep.subr.bf16.mxu0 0
    %353 = vmatpush1.bf16.msra.mxu0 0
    %354 = vmatprep.subr.bf16.mxu0 0
    %355 = vmatpush1.bf16.msra.mxu0 0
    %356 = vmatprep.subr.bf16.mxu0 0
    %357 = vmatpush1.bf16.msra.mxu0 0
    %358 = vmatprep.subr.bf16.mxu0 0
    %359 = vmatpush1.bf16.msra.mxu0 0
    %360 = vmatprep.subr.bf16.mxu0 0
    %361 = vmatpush1.bf16.msra.mxu0 0
    %362 = vmatprep.subr.bf16.mxu0 0
    %363 = vmatpush1.bf16.msra.mxu0 0
    %364 = vmatprep.subr.bf16.mxu0 0
    %365 = vmatpush1.bf16.msra.mxu0 0
    %366 = vmatprep.subr.bf16.mxu0 0
    %367 = vmatpush1.bf16.msra.mxu0 0
    %368 = vmatprep.subr.bf16.mxu0 0
    %369 = vmatpush1.bf16.msra.mxu0 0
    %370 = vmatprep.mubr.bf16.mxu0 0
    %371 = vmatmul.mubr.bf16.gmra.mrb[0].mxu0 %v336
    %v372 = vpop.f32.mrb[0].mxu0
    %v373 = vadd.f32 %v309, %v372
    %v374 = vpop.f32.mrb[0].mxu0
    %v375 = vpop.f32.mrb[0].mxu0
    %v376 = vadd.f32 %v309, %v375
    %v377 = vpop.f32.mrb[0].mxu0
    %378 = vdwg.mxu0
    %v379 = vpack.c.bf16 %v376, %v373
    %v380 = vld [vmem:[%s7] sm:$0xf]
    %v381 = vld [vmem:[%s7 + $0x4] sm:$0xf]
    %v382 = vld [vmem:[%s7 + $0x8] sm:$0xf]
    %v383 = vld [vmem:[%s7 + $0xc] sm:$0xf]
    %v384 = vld [vmem:[%s8] sm:$0x1]
    %v386 = vlaneseq
    %v387 = vshrl.u32 %v386, 7
    %v388 = vsub.s32 0, %v387
    %v389 = vrot.slane %v384, %v388
    %v395 = vunpack.c.l.b16 %v380
    %v396 = vunpack.c.l.b16 %v381
    %v397 = vunpack.c.l.b16 %v382
    %v398 = vunpack.c.l.b16 %v383
    %v399 = vpack.c.b16 %v396, %v395
    %v400 = vpack.c.b16 %v398, %v397
    %vm403 = vcmask 261120
    %v405 = vsel %vm403, %v379, 0
    %407 = vmatprep.subr.bf16.mxu0 0
    %408 = vmatpush1.bf16.msra.mxu0 %v399
    %409 = vmatprep.subr.bf16.mxu0 0
    %410 = vmatpush1.bf16.msra.mxu0 %v400
    %411 = vmatprep.subr.bf16.mxu0 0
    %412 = vmatpush1.bf16.msra.mxu0 0
    %413 = vmatprep.subr.bf16.mxu0 0
    %414 = vmatpush1.bf16.msra.mxu0 0
    %415 = vmatprep.subr.bf16.mxu0 0
    %416 = vmatpush1.bf16.msra.mxu0 0
    %417 = vmatprep.subr.bf16.mxu0 0
    %418 = vmatpush1.bf16.msra.mxu0 0
    %419 = vmatprep.subr.bf16.mxu0 0
    %420 = vmatpush1.bf16.msra.mxu0 0
    %421 = vmatprep.subr.bf16.mxu0 0
    %422 = vmatpush1.bf16.msra.mxu0 0
    %423 = vmatprep.subr.bf16.mxu0 0
    %424 = vmatpush1.bf16.msra.mxu0 0
    %425 = vmatprep.subr.bf16.mxu0 0
    %426 = vmatpush1.bf16.msra.mxu0 0
    %427 = vmatprep.subr.bf16.mxu0 0
    %428 = vmatpush1.bf16.msra.mxu0 0
    %429 = vmatprep.subr.bf16.mxu0 0
    %430 = vmatpush1.bf16.msra.mxu0 0
    %431 = vmatprep.subr.bf16.mxu0 0
    %432 = vmatpush1.bf16.msra.mxu0 0
    %433 = vmatprep.subr.bf16.mxu0 0
    %434 = vmatpush1.bf16.msra.mxu0 0
    %435 = vmatprep.subr.bf16.mxu0 0
    %436 = vmatpush1.bf16.msra.mxu0 0
    %437 = vmatprep.subr.bf16.mxu0 0
    %438 = vmatpush1.bf16.msra.mxu0 0
    %439 = vmatprep.mubr.bf16.mxu0 0
    %440 = vmatmul.mubr.bf16.gmra.mrb[0].mxu0 %v405
    %v441 = vpop.f32.mrb[0].mxu0
    %v442 = vadd.f32 %v389, %v441
    %v443 = vpop.f32.mrb[0].mxu0
    %v444 = vpop.f32.mrb[0].mxu0
    %v445 = vadd.f32 %v389, %v444
    %v446 = vpop.f32.mrb[0].mxu0
    %447 = vdwg.mxu0
    %v448 = vpack.c.bf16 %v445, %v442
    %v449 = vld [vmem:[%s9] sm:$0xf]
    %v450 = vld [vmem:[%s9 + $0x4] sm:$0xf]
    %v451 = vld [vmem:[%s9 + $0x8] sm:$0xf]
    %v452 = vld [vmem:[%s9 + $0xc] sm:$0xf]
    %v453 = vld [vmem:[%s9 + $0x10] sm:$0xf]
    %v454 = vld [vmem:[%s9 + $0x14] sm:$0xf]
    %v455 = vld [vmem:[%s9 + $0x18] sm:$0xf]
    %v456 = vld [vmem:[%s9 + $0x1c] sm:$0xf]
    %v457 = vld [vmem:[%s9 + $0x20] sm:$0xf]
    %v458 = vld [vmem:[%s9 + $0x24] sm:$0xf]
    %v459 = vld [vmem:[%s9 + $0x28] sm:$0xf]
    %v460 = vld [vmem:[%s9 + $0x2c] sm:$0xf]
    %v461 = vld [vmem:[%s9 + $0x30] sm:$0xf]
    %v462 = vld [vmem:[%s9 + $0x34] sm:$0xf]
    %v463 = vld [vmem:[%s9 + $0x38] sm:$0xf]
    %v464 = vld [vmem:[%s9 + $0x3c] sm:$0xf]
    %v465 = vld [vmem:[%s10] sm:$0x1]
    %v467 = vlaneseq
    %v468 = vshrl.u32 %v467, 7
    %v469 = vsub.s32 0, %v468
    %v470 = vrot.slane %v465, %v469
    %v488 = vunpack.c.l.b16 %v449
    %v489 = vunpack.c.l.b16 %v450
    %v490 = vunpack.c.l.b16 %v451
    %v491 = vunpack.c.l.b16 %v452
    %v492 = vunpack.c.l.b16 %v453
    %v493 = vunpack.c.l.b16 %v454
    %v494 = vunpack.c.l.b16 %v455
    %v495 = vunpack.c.l.b16 %v456
    %v496 = vunpack.c.l.b16 %v457
    %v497 = vunpack.c.l.b16 %v458
    %v498 = vunpack.c.l.b16 %v459
    %v499 = vunpack.c.l.b16 %v460
    %v500 = vunpack.c.l.b16 %v461
    %v501 = vunpack.c.l.b16 %v462
    %v502 = vunpack.c.l.b16 %v463
    %v503 = vunpack.c.l.b16 %v464
    %v504 = vpack.c.b16 %v489, %v488
    %v505 = vpack.c.b16 %v491, %v490
    %v506 = vpack.c.b16 %v493, %v492
    %v507 = vpack.c.b16 %v495, %v494
    %v508 = vpack.c.b16 %v497, %v496
    %v509 = vpack.c.b16 %v499, %v498
    %v510 = vpack.c.b16 %v501, %v500
    %v511 = vpack.c.b16 %v503, %v502
    %520 = vmatprep.subr.bf16.mxu0 0
    %521 = vmatpush1.bf16.msra.mxu0 %v504
    %522 = vmatprep.subr.bf16.mxu0 0
    %523 = vmatpush1.bf16.msra.mxu0 %v505
    %524 = vmatprep.subr.bf16.mxu0 0
    %525 = vmatpush1.bf16.msra.mxu0 %v506
    %526 = vmatprep.subr.bf16.mxu0 0
    %527 = vmatpush1.bf16.msra.mxu0 %v507
    %528 = vmatprep.subr.bf16.mxu0 0
    %529 = vmatpush1.bf16.msra.mxu0 %v508
    %530 = vmatprep.subr.bf16.mxu0 0
    %531 = vmatpush1.bf16.msra.mxu0 %v509
    %532 = vmatprep.subr.bf16.mxu0 0
    %533 = vmatpush1.bf16.msra.mxu0 %v510
    %534 = vmatprep.subr.bf16.mxu0 0
    %535 = vmatpush1.bf16.msra.mxu0 %v511
    %536 = vmatprep.subr.bf16.mxu0 0
    %537 = vmatpush1.bf16.msra.mxu0 0
    %538 = vmatprep.subr.bf16.mxu0 0
    %539 = vmatpush1.bf16.msra.mxu0 0
    %540 = vmatprep.subr.bf16.mxu0 0
    %541 = vmatpush1.bf16.msra.mxu0 0
    %542 = vmatprep.subr.bf16.mxu0 0
    %543 = vmatpush1.bf16.msra.mxu0 0
    %544 = vmatprep.subr.bf16.mxu0 0
    %545 = vmatpush1.bf16.msra.mxu0 0
    %546 = vmatprep.subr.bf16.mxu0 0
    %547 = vmatpush1.bf16.msra.mxu0 0
    %548 = vmatprep.subr.bf16.mxu0 0
    %549 = vmatpush1.bf16.msra.mxu0 0
    %550 = vmatprep.subr.bf16.mxu0 0
    %551 = vmatpush1.bf16.msra.mxu0 0
    %552 = vmatprep.mubr.bf16.mxu0 0
    %553 = vmatmul.mubr.bf16.gmra.mrb[0].mxu0 %v448
    %v554 = vpop.f32.mrb[0].mxu0
    %v555 = vadd.f32 %v470, %v554
    %v556 = vpop.f32.mrb[0].mxu0
    %v557 = vpop.f32.mrb[0].mxu0
    %v558 = vadd.f32 %v470, %v557
    %v559 = vpop.f32.mrb[0].mxu0
    %560 = vdwg.mxu0
    %v561 = vld [vmem:[%s11] sm:$0x1]
    %v562 = vld [vmem:[%s12] sm:$0x1]
    %v563 = vsel %vm245, %v555, 0.0
    %564 = vadd.xlane.f32.xlu0 %v563
    %v565 = vpop.xlane.xlu0 %564
    %v566 = vsel %vm245, %v558, 0.0
    %567 = vadd.xlane.f32.xlu0 %v566
    %v568 = vpop.xlane.xlu0 %567
    %v569 = vmul.f32 %v565, %v252
    %v570 = vmul.f32 %v568, %v252
    %v571 = vsub.f32 %v555, %v569
    %v572 = vsub.f32 %v558, %v570
    %v573 = vmul.f32 %v571, %v571
    %v574 = vmul.f32 %v572, %v572
    %v575 = vsel %vm245, %v573, 0.0
    %576 = vadd.xlane.f32.xlu0 %v575
    %v577 = vpop.xlane.xlu0 %576
    %v578 = vsel %vm245, %v574, 0.0
    %579 = vadd.xlane.f32.xlu0 %v578
    %v580 = vpop.xlane.xlu0 %579
    %v581 = vmul.f32 %v577, %v252
    %v582 = vmul.f32 %v580, %v252
    %v583 = vadd.f32 %v581, 1e-05
    %v584 = vadd.f32 %v582, 1e-05
    %v585 = vrsqrt.pop %v583
    %v586 = vrsqrt.pop %v584
    %v587 = vmul.f32 %v571, %v585
    %v588 = vmul.f32 %v572, %v586
    %v590 = vlaneseq
    %v591 = vshrl.u32 %v590, 7
    %v592 = vsub.s32 0, %v591
    %v593 = vrot.slane %v561, %v592
    %v595 = vmul.f32 %v587, %v593
    %v596 = vmul.f32 %v588, %v593
    %v598 = vlaneseq
    %v599 = vshrl.u32 %v598, 7
    %v600 = vsub.s32 0, %v599
    %v601 = vrot.slane %v562, %v600
    %v603 = vadd.f32 %v595, %v601
    %v604 = vadd.f32 %v596, %v601
    %vm605 = vcmp.ge.f32.partialorder %v603, 0.0
    %vm606 = vcmp.ge.f32.partialorder %v604, 0.0
    %v607 = vmul.f32 %v603, 0.01
    %v608 = vmul.f32 %v604, 0.01
    %v609 = vsel %vm605, %v603, %v607
    %v610 = vsel %vm606, %v604, %v608
    %v611 = vpack.c.bf16 %v610, %v609
    %v612 = vld [vmem:[%s13] sm:$0xff]
    %v613 = vld [vmem:[%s13 + $0x8] sm:$0xff]
    %v614 = vld [vmem:[%s13 + $0x10] sm:$0xff]
    %v615 = vld [vmem:[%s13 + $0x18] sm:$0xff]
    %v616 = vld [vmem:[%s13 + $0x20] sm:$0xff]
    %v617 = vld [vmem:[%s13 + $0x28] sm:$0xff]
    %v618 = vld [vmem:[%s13 + $0x30] sm:$0xff]
    %v619 = vld [vmem:[%s13 + $0x38] sm:$0xff]
    %v620 = vld [vmem:[%s14] sm:$0x3]
    %v622 = vlaneseq
    %v623 = vshrl.u32 %v622, 7
    %v624 = vsub.s32 0, %v623
    %v625 = vrot.slane %v620, %v624
    %v626 = vlaneseq
    %v627 = vshrl.u32 %v626, 7
    %v628 = vsub.s32 1, %v627
    %v629 = vrot.slane %v620, %v628
    %v640 = vunpack.c.l.b16 %v612
    %v641 = vunpack.c.h.b16 %v612
    %v642 = vunpack.c.l.b16 %v613
    %v643 = vunpack.c.h.b16 %v613
    %v644 = vunpack.c.l.b16 %v614
    %v645 = vunpack.c.h.b16 %v614
    %v646 = vunpack.c.l.b16 %v615
    %v647 = vunpack.c.h.b16 %v615
    %v648 = vunpack.c.l.b16 %v616
    %v649 = vunpack.c.h.b16 %v616
    %v650 = vunpack.c.l.b16 %v617
    %v651 = vunpack.c.h.b16 %v617
    %v652 = vunpack.c.l.b16 %v618
    %v653 = vunpack.c.h.b16 %v618
    %v654 = vunpack.c.l.b16 %v619
    %v655 = vunpack.c.h.b16 %v619
    %v656 = vpack.c.b16 %v642, %v640
    %v657 = vpack.c.b16 %v643, %v641
    %v658 = vpack.c.b16 %v646, %v644
    %v659 = vpack.c.b16 %v647, %v645
    %v660 = vpack.c.b16 %v650, %v648
    %v661 = vpack.c.b16 %v651, %v649
    %v662 = vpack.c.b16 %v654, %v652
    %v663 = vpack.c.b16 %v655, %v653
    %v673 = vsel %vm245, %v611, 0
    %675 = vmatprep.subr.bf16.mxu0 %v657
    %676 = vmatpush1.bf16.msra.mxu0 %v656
    %677 = vmatprep.subr.bf16.mxu0 %v659
    %678 = vmatpush1.bf16.msra.mxu0 %v658
    %679 = vmatprep.subr.bf16.mxu0 %v661
    %680 = vmatpush1.bf16.msra.mxu0 %v660
    %681 = vmatprep.subr.bf16.mxu0 %v663
    %682 = vmatpush1.bf16.msra.mxu0 %v662
    %683 = vmatprep.subr.bf16.mxu0 0
    %684 = vmatpush1.bf16.msra.mxu0 0
    %685 = vmatprep.subr.bf16.mxu0 0
    %686 = vmatpush1.bf16.msra.mxu0 0
    %687 = vmatprep.subr.bf16.mxu0 0
    %688 = vmatpush1.bf16.msra.mxu0 0
    %689 = vmatprep.subr.bf16.mxu0 0
    %690 = vmatpush1.bf16.msra.mxu0 0
    %691 = vmatprep.subr.bf16.mxu0 0
    %692 = vmatpush1.bf16.msra.mxu0 0
    %693 = vmatprep.subr.bf16.mxu0 0
    %694 = vmatpush1.bf16.msra.mxu0 0
    %695 = vmatprep.subr.bf16.mxu0 0
    %696 = vmatpush1.bf16.msra.mxu0 0
    %697 = vmatprep.subr.bf16.mxu0 0
    %698 = vmatpush1.bf16.msra.mxu0 0
    %699 = vmatprep.subr.bf16.mxu0 0
    %700 = vmatpush1.bf16.msra.mxu0 0
    %701 = vmatprep.subr.bf16.mxu0 0
    %702 = vmatpush1.bf16.msra.mxu0 0
    %703 = vmatprep.subr.bf16.mxu0 0
    %704 = vmatpush1.bf16.msra.mxu0 0
    %705 = vmatprep.subr.bf16.mxu0 0
    %706 = vmatpush1.bf16.msra.mxu0 0
    %707 = vmatprep.mubr.bf16.mxu0 0
    %708 = vmatmul.mubr.bf16.gmra.mrb[0].mxu0 %v673
    %v709 = vpop.f32.mrb[0].mxu0
    %v710 = vadd.f32 %v625, %v709
    %v711 = vpop.f32.mrb[0].mxu0
    %v712 = vadd.f32 %v629, %v711
    %v713 = vpop.f32.mrb[0].mxu0
    %v714 = vadd.f32 %v625, %v713
    %v715 = vpop.f32.mrb[0].mxu0
    %v716 = vadd.f32 %v629, %v715
    %717 = vdwg.mxu0
    %v718 = vsub.f32 0.0, %v710
    %v719 = vsub.f32 0.0, %v712
    %v720 = vsub.f32 0.0, %v714
    %v721 = vsub.f32 0.0, %v716
    %v722 = vmul.f32 %v718, 1.442695
    %v723 = vpow.pop %v722
    %v724 = vmul.f32 %v719, 1.442695
    %v725 = vpow.pop %v724
    %v726 = vmul.f32 %v720, 1.442695
    %v727 = vpow.pop %v726
    %v728 = vmul.f32 %v721, 1.442695
    %v729 = vpow.pop %v728
    %v730 = vadd.f32 %v723, 1.0
    %v731 = vadd.f32 %v725, 1.0
    %v732 = vadd.f32 %v727, 1.0
    %v733 = vadd.f32 %v729, 1.0
    %v734 = vrcp.pop %v730
    %v735 = vrcp.pop %v731
    %v736 = vrcp.pop %v732
    %v737 = vrcp.pop %v733
    %v738 = vpack.c.bf16 %v736, %v734
    %v739 = vpack.c.bf16 %v737, %v735
    %v742 = vunpack.c.l.b16 %v738
    %v743 = vunpack.c.l.b16 %v739
    %v744 = vunpack.c.h.b16 %v738
    %v745 = vunpack.c.h.b16 %v739
    %v746 = vpack.c.b16 %v743, %v742
    %v747 = vpack.c.b16 %v745, %v744
    %750 = vst [vmem:[#allocation2] sm:$0xff] %v746
    %751 = vst [vmem:[#allocation2 + $0x8] sm:$0xff] %v747
    %752 = vst [vmem:[#allocation4] sm:$0xff] %v442
    %753 = vst [vmem:[#allocation4 + $0x8] sm:$0xff] %v445
    // Predicated region
    $region62: #{tpu_custom_call.1} parent=1 // pred_check
      _
    $region63: #{tpu_custom_call.1} parent=1 // pred_check_branch
      %755 = sbr.rel (0) target = $region65
    $region64: #{tpu_custom_call.1} parent=1 // pred_region
      %s757 = ssub.s32 256, 256
      %758 = vsyncadd [#allocation3], %s757
      %s759 = sshll.u32 [#allocation2], 4
      %s760 = int_to_ptr.vmem [resolvable:$true] %s759
      %765 = dma.vmem_to_hbm [thread:$0]  %s760, 256, %s15, [#allocation3], 128, 128, 8
    $region65: #{tpu_custom_call.1} parent=1 // pred_fallthru
      _
    // Predicated region
    $region66: #{tpu_custom_call.1} parent=1 // pred_check
      _
    $region67: #{tpu_custom_call.1} parent=1 // pred_check_branch
      %767 = sbr.rel (0) target = $region69
    $region68: #{tpu_custom_call.1} parent=1 // pred_region
      %s769 = ssub.s32 256, 256
      %770 = vsyncadd [#allocation5], %s769
      %s771 = sshll.u32 [#allocation4], 4
      %s772 = int_to_ptr.vmem [resolvable:$true] %s771
      %777 = dma.vmem_to_hbm [thread:$0]  %s772, 256, %s16, [#allocation5], 128, 128, 8
    $region69: #{tpu_custom_call.1} parent=1 // pred_fallthru
      _
    // Predicated region
    $region70: #{tpu_custom_call.1} parent=1 // pred_check
      _
    $region71: #{tpu_custom_call.1} parent=1 // pred_check_branch
      %779 = sbr.rel (0) target = $region73
    $region72: #{tpu_custom_call.1} parent=1 // pred_region
      %780 = dma.done [#allocation3], 256
    $region73: #{tpu_custom_call.1} parent=1 // pred_fallthru
      _
    // Predicated region
    $region74: #{tpu_custom_call.1} parent=1 // pred_check
      _
    $region75: #{tpu_custom_call.1} parent=1 // pred_check_branch
      %782 = sbr.rel (0) target = $region77
    $region76: #{tpu_custom_call.1} parent=1 // pred_region
      %783 = dma.done [#allocation5], 256
    $region77: #{tpu_custom_call.1} parent=1 // pred_fallthru
      _
    %784 = vsyncpa [#allocation3], 1
    %785 = vsyncpa [#allocation5], 1

</llo_original>
